<compile_context>
chip_gen: v5e
topology: v5e:2x2
jax: 0.10.0
libtpu: 0.0.40
codegen_flags: <defaults>
</compile_context>

<pallas_src>
import math

import jax
import jax.numpy as jnp
from jax.experimental import pallas as pl
from jax.experimental.pallas import tpu as pltpu


def _layer_norm(x, gamma, beta, eps=1e-5):
    """LayerNorm over last dim (PyTorch nn.LayerNorm: biased variance, eps=1e-5)."""
    mu = jnp.mean(x, axis=-1, keepdims=True)
    xc = x - mu
    var = jnp.mean(xc * xc, axis=-1, keepdims=True)
    return xc * jax.lax.rsqrt(var + eps) * gamma + beta


def _make_decoder_kernel(n_heads: int, bpb: int, lp: int, ls: int):
    """Kernel closure with static head count / batch-chunk / sequence lengths."""

    def kernel(x_ref, s_ref, mask_ref,
               wq_ref, bq_ref, wk_ref, bk_ref, wv_ref, bv_ref,
               wo_ref, bo_ref, g2_ref, be2_ref,
               w1_ref, b1_ref, w2_ref, b2_ref, g3_ref, be3_ref,
               out_ref):
        f32 = jnp.float32
        x = x_ref[...]                          # (bpb*Lp, D) f32 queries / residual
        s = s_ref[...]                          # (bpb*Ls, D) f32 keys / values
        mask = mask_ref[...]                    # (bpb, 1, Ls) int32 seq_mask
        d = x.shape[-1]
        dh = d // n_heads

        # Fused lane-dense Q/K/V projections: bf16 operands, f32 MXU accumulation.
        # The 1/sqrt(dh) softmax scale is folded into wq/bq on the host.
        xb = x.astype(jnp.bfloat16)
        sb = s.astype(jnp.bfloat16)
        q = jnp.dot(xb, wq_ref[...], preferred_element_type=f32) + bq_ref[...]
        k = jnp.dot(sb, wk_ref[...], preferred_element_type=f32) + bk_ref[...]
        v = jnp.dot(sb, wv_ref[...], preferred_element_type=f32) + bv_ref[...]

        # Per-(batch, head) attention on static row/lane slices of Q/K/V.
        neg_big = jnp.float32(-1e10)
        ctx_rows = []
        for b in range(bpb):                    # static, unrolled at trace time
            # Hoist the mask broadcast out of the head loop.
            valid = jnp.broadcast_to(mask[b] != 0, (lp, ls))     # (Lp, Ls) bool
            q_b = q[b * lp:(b + 1) * lp, :]
            k_b = k[b * ls:(b + 1) * ls, :]
            v_b = v[b * ls:(b + 1) * ls, :]
            head_ctx = []
            for h in range(n_heads):            # static, unrolled
                qh = q_b[:, h * dh:(h + 1) * dh]
                kh = k_b[:, h * dh:(h + 1) * dh]
                vh = v_b[:, h * dh:(h + 1) * dh]
                # (Lp, Dh) x (Ls, Dh) contracted on Dh -> (Lp, Ls)
                scores = jax.lax.dot_general(
                    qh, kh, (((1,), (1,)), ((), ())), preferred_element_type=f32)
                scores = jnp.where(valid, scores, neg_big)       # masked_fill(mask==0)
                m = jnp.max(scores, axis=-1, keepdims=True)
                e = jnp.exp(scores - m)
                p = e * pl.reciprocal(jnp.sum(e, axis=-1, keepdims=True), approx=True)
                head_ctx.append(jnp.dot(p, vh, preferred_element_type=f32))  # (Lp, Dh)
            ctx_rows.append(jnp.concatenate(head_ctx, axis=-1))              # (Lp, D)
        ctx = jnp.concatenate(ctx_rows, axis=0)                              # (bpb*Lp, D)

        # Output projection: one full-width, 128-deep contraction.
        attn = jnp.dot(ctx.astype(jnp.bfloat16), wo_ref[...],
                       preferred_element_type=f32) + bo_ref[...]

        # dropout_low is identity at inference; residual + LayerNorm2.
        y = _layer_norm(attn + x, g2_ref[...], be2_ref[...])

        # FFN: Linear -> ReLU -> Linear (bf16 operands, f32 accumulation).
        h1 = jnp.dot(y.astype(jnp.bfloat16), w1_ref[...],
                     preferred_element_type=f32) + b1_ref[...]
        h1 = jnp.maximum(h1, 0.0)
        h2 = jnp.dot(h1.astype(jnp.bfloat16), w2_ref[...],
                     preferred_element_type=f32) + b2_ref[...]

        # dropout_low identity; residual + LayerNorm3.
        out_ref[...] = _layer_norm(h2 + y, g3_ref[...], be3_ref[...]).astype(out_ref.dtype)

    return kernel


def transformer_decoder(seq, phrase, seq_mask, phrase_mask, params, n_heads,
                        num_blocks=2):
    """Mirrors TransformerDecoder.forward(seq, phrase, seq_mask, phrase_mask).

    seq:      (B, Ls, D) encoder output (keys/values)
    phrase:   (B, Lp, D) decoder input (queries)
    seq_mask: (B, Ls) int/bool, 0 = masked-out key position
    phrase_mask: unused by the PyTorch forward (kept for signature fidelity)
    num_blocks: grid steps over batch chunks. 2 (default) keeps both v7x TensorCores
                busy; 1 row-stacks the whole batch into a single step (best on the
                single-TensorCore v5e/v6e chips).
    """
    del phrase_mask                      # unused by the reference forward()
    B, Lp, D = phrase.shape
    Ls = seq.shape[1]
    dh = D // n_heads
    F = params["w1"].shape[1]

    num_blocks = max(1, min(num_blocks, B))
    assert B % num_blocks == 0, "batch must divide evenly into grid blocks"
    bpb = B // num_blocks                # batch elements row-stacked per grid step
    rows_p, rows_s = bpb * Lp, bpb * Ls
    assert rows_p % 8 == 0 and rows_s % 8 == 0 and D % 128 == 0 and F % 128 == 0

    bf16 = jnp.bfloat16
    scale = 1.0 / math.sqrt(dh)
    # Weight-side matmul operands in bf16 (halves weight DMA); softmax scale folded
    # into the query projection; biases / LayerNorm params stay f32 (VPU adds).
    wq = (params["wq"] * scale).astype(bf16)
    bq = params["bq"] * scale
    wk = params["wk"].astype(bf16)
    wv = params["wv"].astype(bf16)
    wo = params["wo"].astype(bf16)
    w1 = params["w1"].astype(bf16)
    w2 = params["w2"].astype(bf16)

    # Row-stacked, lane-dense activations; mask kept per-batch.
    phrase2 = phrase.reshape(B * Lp, D)
    seq2 = seq.reshape(B * Ls, D)
    mask3 = seq_mask.reshape(B, 1, Ls).astype(jnp.int32)

    act = lambda r: pl.BlockSpec((r, D), lambda i: (i, 0))        # per-chunk activations
    const2 = lambda shp: pl.BlockSpec(shp, lambda i: (0, 0))      # VMEM-resident weights

    flops = 2 * B * (Lp * D * D + 2 * Ls * D * D      # Q/K/V projections
                     + 2 * Lp * Ls * D                # scores + prob@V (all heads)
                     + Lp * D * D                     # output projection
                     + 2 * Lp * D * F)                # FFN
    transcendentals = B * n_heads * Lp * Ls           # softmax exp
    bytes_accessed = (4 * (2 * B * Lp * D + B * Ls * D + B * Ls)   # f32 activations
                      + 2 * (4 * D * D + 2 * D * F)                # bf16 weights
                      + 4 * (8 * D + F))                           # f32 biases / LN params

    out2 = pl.pallas_call(
        _make_decoder_kernel(n_heads, bpb, Lp, Ls),
        out_shape=jax.ShapeDtypeStruct((B * Lp, D), phrase.dtype),
        grid=(num_blocks,),
        in_specs=[
            act(rows_p),                                      # phrase rows (queries)
            act(rows_s),                                      # seq rows (keys/values)
            pl.BlockSpec((bpb, 1, Ls), lambda i: (i, 0, 0)),  # seq_mask
            const2((D, D)), const2((1, D)),                   # Wq (pre-scaled), bq
            const2((D, D)), const2((1, D)),                   # Wk, bk
            const2((D, D)), const2((1, D)),                   # Wv, bv
            const2((D, D)), const2((1, D)),                   # Wo, bo
            const2((1, D)), const2((1, D)),                   # lnorm2 gamma, beta
            const2((D, F)), const2((1, F)),                   # ffn W1, b1
            const2((F, D)), const2((1, D)),                   # ffn W2, b2
            const2((1, D)), const2((1, D)),                   # lnorm3 gamma, beta
        ],
        out_specs=act(rows_p),
        compiler_params=pltpu.CompilerParams(
            dimension_semantics=("parallel",)),               # shard chunks across TCs
        cost_estimate=pl.CostEstimate(flops=flops,
                                      transcendentals=transcendentals,
                                      bytes_accessed=bytes_accessed),
    )(phrase2, seq2, mask3,
      wq, bq, wk, params["bk"], wv, params["bv"], wo, params["bo"],
      params["g2"], params["be2"],
      w1, params["b1"], w2, params["b2"],
      params["g3"], params["be3"])
    return out2.reshape(B, Lp, D)


def _reference(seq, phrase, seq_mask, params, n_heads):
    """Pure-JAX reference of the PyTorch forward (HIGHEST-precision f32 matmuls)."""
    P = jax.lax.Precision.HIGHEST
    B, Lp, D = phrase.shape
    Ls = seq.shape[1]
    dh = D // n_heads

    def lin(t, w, b):
        return jnp.einsum("bld,do->blo", t, w, precision=P) + b

    q = lin(phrase, params["wq"], params["bq"])
    k = lin(seq, params["wk"], params["bk"])
    v = lin(seq, params["wv"], params["bv"])
    qh = q.reshape(B, Lp, n_heads, dh).transpose(0, 2, 1, 3)
    kh = k.reshape(B, Ls, n_heads, dh).transpose(0, 2, 1, 3)
    vh = v.reshape(B, Ls, n_heads, dh).transpose(0, 2, 1, 3)

    scores = jnp.einsum("bhqd,bhkd->bhqk", qh, kh, precision=P) / math.sqrt(dh)
    scores = jnp.where(seq_mask[:, None, None, :] != 0, scores, -1e10)
    attn = jax.nn.softmax(scores, axis=-1)
    ctx = jnp.einsum("bhqk,bhkd->bhqd", attn, vh, precision=P)
    ctx = ctx.transpose(0, 2, 1, 3).reshape(B, Lp, D)

    x = lin(ctx, params["wo"], params["bo"]) + phrase
    x = _layer_norm(x, params["g2"], params["be2"])
    y = jax.nn.relu(lin(x, params["w1"], params["b1"]))
    y = lin(y, params["w2"], params["b2"]) + x
    return _layer_norm(y, params["g3"], params["be3"])


if __name__ == "__main__":
    # Shapes consistent with the module: embed_dim=128 (lane-dense), 4 heads,
    # ffn_dim=256, batch=2, phrase length 8, encoder sequence length 16.
    B, Lp, Ls = 2, 8, 16
    D, H, F = 128, 4, 256

    key = jax.random.PRNGKey(0)
    ks = jax.random.split(key, 20)

    def w(k, shape, scale=0.05):
        return (scale * jax.random.normal(k, shape)).astype(jnp.float32)

    params = {
        "wq": w(ks[0], (D, D)), "bq": w(ks[1], (1, D), 0.02),
        "wk": w(ks[2], (D, D)), "bk": w(ks[3], (1, D), 0.02),
        "wv": w(ks[4], (D, D)), "bv": w(ks[5], (1, D), 0.02),
        "wo": w(ks[6], (D, D)), "bo": w(ks[7], (1, D), 0.02),
        "w1": w(ks[8], (D, F)), "b1": w(ks[9], (1, F), 0.02),
        "w2": w(ks[10], (F, D)), "b2": w(ks[11], (1, D), 0.02),
        "g2": (1.0 + 0.05 * jax.random.normal(ks[12], (1, D))).astype(jnp.float32),
        "be2": w(ks[13], (1, D), 0.02),
        "g3": (1.0 + 0.05 * jax.random.normal(ks[14], (1, D))).astype(jnp.float32),
        "be3": w(ks[15], (1, D), 0.02),
    }

    phrase = jax.random.normal(ks[16], (B, Lp, D), dtype=jnp.float32)
    seq = jax.random.normal(ks[17], (B, Ls, D), dtype=jnp.float32)
    seq_mask = (jax.random.uniform(ks[18], (B, Ls)) > 0.25).astype(jnp.int32)
    seq_mask = seq_mask.at[:, 0].set(1)               # at least one valid key per row
    phrase_mask = jnp.ones((B, Lp), dtype=jnp.int32)  # unused by forward()

    ref = _reference(seq, phrase, seq_mask, params, n_heads=H)

    # num_blocks=2: one batch chunk per TensorCore (dual-TC v7x);
    # num_blocks=1: whole batch row-stacked in a single step (single-TC v5e/v6e).
    for nb in (2, 1):
        out = transformer_decoder(seq, phrase, seq_mask, phrase_mask, params,
                                  n_heads=H, num_blocks=nb)
        out = jax.block_until_ready(out)
        assert out.shape == (B, Lp, D)
        assert bool(jnp.all(jnp.isfinite(out)))
        max_err = float(jnp.max(jnp.abs(out - ref)))
        # bf16 matmul operands (f32 accumulation) vs a Precision.HIGHEST f32 reference.
        assert max_err < 2.5e-2, f"num_blocks={nb}: max abs err {max_err}"

    print("KERNEL_OK")
</pallas_src>

<mosaic_0001>
module attributes {stable_mosaic.version = 11 : i64} {
  func.func @kernel(%arg0: i32, %arg1: memref<8x128xf32, #tpu.memory_space<vmem>>, %arg2: memref<16x128xf32, #tpu.memory_space<vmem>>, %arg3: memref<1x1x16xi32, #tpu.memory_space<vmem>>, %arg4: memref<128x128xbf16, #tpu.memory_space<vmem>>, %arg5: memref<1x128xf32, #tpu.memory_space<vmem>>, %arg6: memref<128x128xbf16, #tpu.memory_space<vmem>>, %arg7: memref<1x128xf32, #tpu.memory_space<vmem>>, %arg8: memref<128x128xbf16, #tpu.memory_space<vmem>>, %arg9: memref<1x128xf32, #tpu.memory_space<vmem>>, %arg10: memref<128x128xbf16, #tpu.memory_space<vmem>>, %arg11: memref<1x128xf32, #tpu.memory_space<vmem>>, %arg12: memref<1x128xf32, #tpu.memory_space<vmem>>, %arg13: memref<1x128xf32, #tpu.memory_space<vmem>>, %arg14: memref<128x256xbf16, #tpu.memory_space<vmem>>, %arg15: memref<1x256xf32, #tpu.memory_space<vmem>>, %arg16: memref<256x128xbf16, #tpu.memory_space<vmem>>, %arg17: memref<1x128xf32, #tpu.memory_space<vmem>>, %arg18: memref<1x128xf32, #tpu.memory_space<vmem>>, %arg19: memref<1x128xf32, #tpu.memory_space<vmem>>, %arg20: memref<8x128xf32, #tpu.memory_space<vmem>>) attributes {dimension_semantics = [#tpu.dimension_semantics<parallel>], iteration_bounds = array<i64: 2>, scalar_prefetch = 0 : i64, scratch_operands = 0 : i64, tpu.core_type = #tpu.core_type<tc>, window_params = [{transform_indices = @transform_0, window_bounds = array<i64: 8, 128>}, {transform_indices = @transform_1, window_bounds = array<i64: 16, 128>}, {transform_indices = @transform_2, window_bounds = array<i64: 1, 1, 16>}, {pipeline_mode = #tpu.pipeline_mode<synchronous>, transform_indices = @transform_3, window_bounds = array<i64: 128, 128>}, {pipeline_mode = #tpu.pipeline_mode<synchronous>, transform_indices = @transform_4, window_bounds = array<i64: 1, 128>}, {pipeline_mode = #tpu.pipeline_mode<synchronous>, transform_indices = @transform_5, window_bounds = array<i64: 128, 128>}, {pipeline_mode = #tpu.pipeline_mode<synchronous>, transform_indices = @transform_6, window_bounds = array<i64: 1, 128>}, {pipeline_mode = #tpu.pipeline_mode<synchronous>, transform_indices = @transform_7, window_bounds = array<i64: 128, 128>}, {pipeline_mode = #tpu.pipeline_mode<synchronous>, transform_indices = @transform_8, window_bounds = array<i64: 1, 128>}, {pipeline_mode = #tpu.pipeline_mode<synchronous>, transform_indices = @transform_9, window_bounds = array<i64: 128, 128>}, {pipeline_mode = #tpu.pipeline_mode<synchronous>, transform_indices = @transform_10, window_bounds = array<i64: 1, 128>}, {pipeline_mode = #tpu.pipeline_mode<synchronous>, transform_indices = @transform_11, window_bounds = array<i64: 1, 128>}, {pipeline_mode = #tpu.pipeline_mode<synchronous>, transform_indices = @transform_12, window_bounds = array<i64: 1, 128>}, {pipeline_mode = #tpu.pipeline_mode<synchronous>, transform_indices = @transform_13, window_bounds = array<i64: 128, 256>}, {pipeline_mode = #tpu.pipeline_mode<synchronous>, transform_indices = @transform_14, window_bounds = array<i64: 1, 256>}, {pipeline_mode = #tpu.pipeline_mode<synchronous>, transform_indices = @transform_15, window_bounds = array<i64: 256, 128>}, {pipeline_mode = #tpu.pipeline_mode<synchronous>, transform_indices = @transform_16, window_bounds = array<i64: 1, 128>}, {pipeline_mode = #tpu.pipeline_mode<synchronous>, transform_indices = @transform_17, window_bounds = array<i64: 1, 128>}, {pipeline_mode = #tpu.pipeline_mode<synchronous>, transform_indices = @transform_18, window_bounds = array<i64: 1, 128>}, {transform_indices = @transform_19, window_bounds = array<i64: 8, 128>}]} {
    %c0 = arith.constant 0 : index
    %c0_0 = arith.constant 0 : index
    %0 = vector.load %arg1[%c0, %c0_0] : memref<8x128xf32, #tpu.memory_space<vmem>>, vector<8x128xf32>
    %c0_1 = arith.constant 0 : index
    %c0_2 = arith.constant 0 : index
    %1 = vector.load %arg2[%c0_1, %c0_2] : memref<16x128xf32, #tpu.memory_space<vmem>>, vector<16x128xf32>
    %c0_3 = arith.constant 0 : index
    %c0_4 = arith.constant 0 : index
    %c0_5 = arith.constant 0 : index
    %2 = vector.load %arg3[%c0_3, %c0_4, %c0_5] : memref<1x1x16xi32, #tpu.memory_space<vmem>>, vector<1x1x16xi32>
    %3 = arith.truncf %0 : vector<8x128xf32> to vector<8x128xbf16>
    %4 = arith.truncf %1 : vector<16x128xf32> to vector<16x128xbf16>
    %c0_6 = arith.constant 0 : index
    %c0_7 = arith.constant 0 : index
    %5 = vector.load %arg4[%c0_6, %c0_7] : memref<128x128xbf16, #tpu.memory_space<vmem>>, vector<128x128xbf16>
    %cst = arith.constant dense<0.000000e+00> : vector<8x128xf32>
    %6 = tpu.matmul %3, %5, %cst {dimension_numbers = #tpu.dot_dimension_numbers<[1], [0], [0], [1], [0, 0, 1, 1], [], []>} : vector<8x128xbf16>, vector<128x128xbf16>, vector<8x128xf32> -> vector<8x128xf32>
    %c0_8 = arith.constant 0 : index
    %c0_9 = arith.constant 0 : index
    %7 = vector.load %arg5[%c0_8, %c0_9] : memref<1x128xf32, #tpu.memory_space<vmem>>, vector<1x128xf32>
    %8 = vector.broadcast %7 : vector<1x128xf32> to vector<8x128xf32>
    %9 = arith.addf %6, %8 : vector<8x128xf32>
    %c0_10 = arith.constant 0 : index
    %c0_11 = arith.constant 0 : index
    %10 = vector.load %arg6[%c0_10, %c0_11] : memref<128x128xbf16, #tpu.memory_space<vmem>>, vector<128x128xbf16>
    %cst_12 = arith.constant dense<0.000000e+00> : vector<16x128xf32>
    %11 = tpu.matmul %4, %10, %cst_12 {dimension_numbers = #tpu.dot_dimension_numbers<[1], [0], [0], [1], [0, 0, 1, 1], [], []>} : vector<16x128xbf16>, vector<128x128xbf16>, vector<16x128xf32> -> vector<16x128xf32>
    %c0_13 = arith.constant 0 : index
    %c0_14 = arith.constant 0 : index
    %12 = vector.load %arg7[%c0_13, %c0_14] : memref<1x128xf32, #tpu.memory_space<vmem>>, vector<1x128xf32>
    %13 = vector.broadcast %12 : vector<1x128xf32> to vector<16x128xf32>
    %14 = arith.addf %11, %13 : vector<16x128xf32>
    %c0_15 = arith.constant 0 : index
    %c0_16 = arith.constant 0 : index
    %15 = vector.load %arg8[%c0_15, %c0_16] : memref<128x128xbf16, #tpu.memory_space<vmem>>, vector<128x128xbf16>
    %cst_17 = arith.constant dense<0.000000e+00> : vector<16x128xf32>
    %16 = tpu.matmul %4, %15, %cst_17 {dimension_numbers = #tpu.dot_dimension_numbers<[1], [0], [0], [1], [0, 0, 1, 1], [], []>} : vector<16x128xbf16>, vector<128x128xbf16>, vector<16x128xf32> -> vector<16x128xf32>
    %c0_18 = arith.constant 0 : index
    %c0_19 = arith.constant 0 : index
    %17 = vector.load %arg9[%c0_18, %c0_19] : memref<1x128xf32, #tpu.memory_space<vmem>>, vector<1x128xf32>
    %18 = vector.broadcast %17 : vector<1x128xf32> to vector<16x128xf32>
    %19 = arith.addf %16, %18 : vector<16x128xf32>
    %20 = vector.shape_cast %2 : vector<1x1x16xi32> to vector<1x16xi32>
    %c0_i32 = arith.constant 0 : i32
    %21 = vector.broadcast %c0_i32 : i32 to vector<1x16xi32>
    %22 = arith.cmpi ne, %20, %21 : vector<1x16xi32>
    %23 = vector.shape_cast %22 : vector<1x16xi1> to vector<1x16xi1>
    %24 = vector.broadcast %23 : vector<1x16xi1> to vector<8x16xi1>
    %25 = vector.extract_strided_slice %9 {offsets = [0, 0], sizes = [8, 32], strides = [1, 1]} : vector<8x128xf32> to vector<8x32xf32>
    %26 = vector.extract_strided_slice %14 {offsets = [0, 0], sizes = [16, 32], strides = [1, 1]} : vector<16x128xf32> to vector<16x32xf32>
    %27 = vector.extract_strided_slice %19 {offsets = [0, 0], sizes = [16, 32], strides = [1, 1]} : vector<16x128xf32> to vector<16x32xf32>
    %cst_20 = arith.constant dense<0.000000e+00> : vector<8x16xf32>
    %28 = tpu.matmul %25, %26, %cst_20 {dimension_numbers = #tpu.dot_dimension_numbers<[1], [1], [0], [0], [0, 0, 1, 0], [], []>} : vector<8x32xf32>, vector<16x32xf32>, vector<8x16xf32> -> vector<8x16xf32>
    %cst_21 = arith.constant -1.000000e+10 : f32
    %29 = vector.broadcast %cst_21 : f32 to vector<8x16xf32>
    %30 = arith.select %24, %28, %29 : vector<8x16xi1>, vector<8x16xf32>
    %cst_22 = arith.constant dense<0xFF800000> : vector<8xf32>
    %31 = vector.multi_reduction <maximumf>, %30, %cst_22 [1] : vector<8x16xf32> to vector<8xf32>
    %32 = vector.shape_cast %31 : vector<8xf32> to vector<8x1xf32>
    %33 = vector.broadcast %32 : vector<8x1xf32> to vector<8x16xf32>
    %34 = arith.subf %30, %33 : vector<8x16xf32>
    %35 = math.exp %34 : vector<8x16xf32>
    %cst_23 = arith.constant dense<0.000000e+00> : vector<8xf32>
    %36 = vector.multi_reduction <add>, %35, %cst_23 [1] : vector<8x16xf32> to vector<8xf32>
    %37 = vector.shape_cast %36 : vector<8xf32> to vector<8x1xf32>
    %38 = tpu.reciprocal %37 {approx = true} : vector<8x1xf32> -> vector<8x1xf32>
    %39 = vector.broadcast %38 : vector<8x1xf32> to vector<8x16xf32>
    %40 = arith.mulf %35, %39 : vector<8x16xf32>
    %cst_24 = arith.constant dense<0.000000e+00> : vector<8x32xf32>
    %41 = tpu.matmul %40, %27, %cst_24 {dimension_numbers = #tpu.dot_dimension_numbers<[1], [0], [0], [1], [0, 0, 1, 1], [], []>} : vector<8x16xf32>, vector<16x32xf32>, vector<8x32xf32> -> vector<8x32xf32>
    %42 = vector.extract_strided_slice %9 {offsets = [0, 32], sizes = [8, 32], strides = [1, 1]} : vector<8x128xf32> to vector<8x32xf32>
    %43 = vector.extract_strided_slice %14 {offsets = [0, 32], sizes = [16, 32], strides = [1, 1]} : vector<16x128xf32> to vector<16x32xf32>
    %44 = vector.extract_strided_slice %19 {offsets = [0, 32], sizes = [16, 32], strides = [1, 1]} : vector<16x128xf32> to vector<16x32xf32>
    %cst_25 = arith.constant dense<0.000000e+00> : vector<8x16xf32>
    %45 = tpu.matmul %42, %43, %cst_25 {dimension_numbers = #tpu.dot_dimension_numbers<[1], [1], [0], [0], [0, 0, 1, 0], [], []>} : vector<8x32xf32>, vector<16x32xf32>, vector<8x16xf32> -> vector<8x16xf32>
    %cst_26 = arith.constant -1.000000e+10 : f32
    %46 = vector.broadcast %cst_26 : f32 to vector<8x16xf32>
    %47 = arith.select %24, %45, %46 : vector<8x16xi1>, vector<8x16xf32>
    %cst_27 = arith.constant dense<0xFF800000> : vector<8xf32>
    %48 = vector.multi_reduction <maximumf>, %47, %cst_27 [1] : vector<8x16xf32> to vector<8xf32>
    %49 = vector.shape_cast %48 : vector<8xf32> to vector<8x1xf32>
    %50 = vector.broadcast %49 : vector<8x1xf32> to vector<8x16xf32>
    %51 = arith.subf %47, %50 : vector<8x16xf32>
    %52 = math.exp %51 : vector<8x16xf32>
    %cst_28 = arith.constant dense<0.000000e+00> : vector<8xf32>
    %53 = vector.multi_reduction <add>, %52, %cst_28 [1] : vector<8x16xf32> to vector<8xf32>
    %54 = vector.shape_cast %53 : vector<8xf32> to vector<8x1xf32>
    %55 = tpu.reciprocal %54 {approx = true} : vector<8x1xf32> -> vector<8x1xf32>
    %56 = vector.broadcast %55 : vector<8x1xf32> to vector<8x16xf32>
    %57 = arith.mulf %52, %56 : vector<8x16xf32>
    %cst_29 = arith.constant dense<0.000000e+00> : vector<8x32xf32>
    %58 = tpu.matmul %57, %44, %cst_29 {dimension_numbers = #tpu.dot_dimension_numbers<[1], [0], [0], [1], [0, 0, 1, 1], [], []>} : vector<8x16xf32>, vector<16x32xf32>, vector<8x32xf32> -> vector<8x32xf32>
    %59 = vector.extract_strided_slice %9 {offsets = [0, 64], sizes = [8, 32], strides = [1, 1]} : vector<8x128xf32> to vector<8x32xf32>
    %60 = vector.extract_strided_slice %14 {offsets = [0, 64], sizes = [16, 32], strides = [1, 1]} : vector<16x128xf32> to vector<16x32xf32>
    %61 = vector.extract_strided_slice %19 {offsets = [0, 64], sizes = [16, 32], strides = [1, 1]} : vector<16x128xf32> to vector<16x32xf32>
    %cst_30 = arith.constant dense<0.000000e+00> : vector<8x16xf32>
    %62 = tpu.matmul %59, %60, %cst_30 {dimension_numbers = #tpu.dot_dimension_numbers<[1], [1], [0], [0], [0, 0, 1, 0], [], []>} : vector<8x32xf32>, vector<16x32xf32>, vector<8x16xf32> -> vector<8x16xf32>
    %cst_31 = arith.constant -1.000000e+10 : f32
    %63 = vector.broadcast %cst_31 : f32 to vector<8x16xf32>
    %64 = arith.select %24, %62, %63 : vector<8x16xi1>, vector<8x16xf32>
    %cst_32 = arith.constant dense<0xFF800000> : vector<8xf32>
    %65 = vector.multi_reduction <maximumf>, %64, %cst_32 [1] : vector<8x16xf32> to vector<8xf32>
    %66 = vector.shape_cast %65 : vector<8xf32> to vector<8x1xf32>
    %67 = vector.broadcast %66 : vector<8x1xf32> to vector<8x16xf32>
    %68 = arith.subf %64, %67 : vector<8x16xf32>
    %69 = math.exp %68 : vector<8x16xf32>
    %cst_33 = arith.constant dense<0.000000e+00> : vector<8xf32>
    %70 = vector.multi_reduction <add>, %69, %cst_33 [1] : vector<8x16xf32> to vector<8xf32>
    %71 = vector.shape_cast %70 : vector<8xf32> to vector<8x1xf32>
    %72 = tpu.reciprocal %71 {approx = true} : vector<8x1xf32> -> vector<8x1xf32>
    %73 = vector.broadcast %72 : vector<8x1xf32> to vector<8x16xf32>
    %74 = arith.mulf %69, %73 : vector<8x16xf32>
    %cst_34 = arith.constant dense<0.000000e+00> : vector<8x32xf32>
    %75 = tpu.matmul %74, %61, %cst_34 {dimension_numbers = #tpu.dot_dimension_numbers<[1], [0], [0], [1], [0, 0, 1, 1], [], []>} : vector<8x16xf32>, vector<16x32xf32>, vector<8x32xf32> -> vector<8x32xf32>
    %76 = vector.extract_strided_slice %9 {offsets = [0, 96], sizes = [8, 32], strides = [1, 1]} : vector<8x128xf32> to vector<8x32xf32>
    %77 = vector.extract_strided_slice %14 {offsets = [0, 96], sizes = [16, 32], strides = [1, 1]} : vector<16x128xf32> to vector<16x32xf32>
    %78 = vector.extract_strided_slice %19 {offsets = [0, 96], sizes = [16, 32], strides = [1, 1]} : vector<16x128xf32> to vector<16x32xf32>
    %cst_35 = arith.constant dense<0.000000e+00> : vector<8x16xf32>
    %79 = tpu.matmul %76, %77, %cst_35 {dimension_numbers = #tpu.dot_dimension_numbers<[1], [1], [0], [0], [0, 0, 1, 0], [], []>} : vector<8x32xf32>, vector<16x32xf32>, vector<8x16xf32> -> vector<8x16xf32>
    %cst_36 = arith.constant -1.000000e+10 : f32
    %80 = vector.broadcast %cst_36 : f32 to vector<8x16xf32>
    %81 = arith.select %24, %79, %80 : vector<8x16xi1>, vector<8x16xf32>
    %cst_37 = arith.constant dense<0xFF800000> : vector<8xf32>
    %82 = vector.multi_reduction <maximumf>, %81, %cst_37 [1] : vector<8x16xf32> to vector<8xf32>
    %83 = vector.shape_cast %82 : vector<8xf32> to vector<8x1xf32>
    %84 = vector.broadcast %83 : vector<8x1xf32> to vector<8x16xf32>
    %85 = arith.subf %81, %84 : vector<8x16xf32>
    %86 = math.exp %85 : vector<8x16xf32>
    %cst_38 = arith.constant dense<0.000000e+00> : vector<8xf32>
    %87 = vector.multi_reduction <add>, %86, %cst_38 [1] : vector<8x16xf32> to vector<8xf32>
    %88 = vector.shape_cast %87 : vector<8xf32> to vector<8x1xf32>
    %89 = tpu.reciprocal %88 {approx = true} : vector<8x1xf32> -> vector<8x1xf32>
    %90 = vector.broadcast %89 : vector<8x1xf32> to vector<8x16xf32>
    %91 = arith.mulf %86, %90 : vector<8x16xf32>
    %cst_39 = arith.constant dense<0.000000e+00> : vector<8x32xf32>
    %92 = tpu.matmul %91, %78, %cst_39 {dimension_numbers = #tpu.dot_dimension_numbers<[1], [0], [0], [1], [0, 0, 1, 1], [], []>} : vector<8x16xf32>, vector<16x32xf32>, vector<8x32xf32> -> vector<8x32xf32>
    %93 = tpu.concatenate %41, %58, %75, %92 in 1 : vector<8x32xf32>, vector<8x32xf32>, vector<8x32xf32>, vector<8x32xf32> -> vector<8x128xf32>
    %94 = arith.truncf %93 : vector<8x128xf32> to vector<8x128xbf16>
    %c0_40 = arith.constant 0 : index
    %c0_41 = arith.constant 0 : index
    %95 = vector.load %arg10[%c0_40, %c0_41] : memref<128x128xbf16, #tpu.memory_space<vmem>>, vector<128x128xbf16>
    %cst_42 = arith.constant dense<0.000000e+00> : vector<8x128xf32>
    %96 = tpu.matmul %94, %95, %cst_42 {dimension_numbers = #tpu.dot_dimension_numbers<[1], [0], [0], [1], [0, 0, 1, 1], [], []>} : vector<8x128xbf16>, vector<128x128xbf16>, vector<8x128xf32> -> vector<8x128xf32>
    %c0_43 = arith.constant 0 : index
    %c0_44 = arith.constant 0 : index
    %97 = vector.load %arg11[%c0_43, %c0_44] : memref<1x128xf32, #tpu.memory_space<vmem>>, vector<1x128xf32>
    %98 = vector.broadcast %97 : vector<1x128xf32> to vector<8x128xf32>
    %99 = arith.addf %96, %98 : vector<8x128xf32>
    %100 = arith.addf %99, %0 : vector<8x128xf32>
    %c0_45 = arith.constant 0 : index
    %c0_46 = arith.constant 0 : index
    %101 = vector.load %arg12[%c0_45, %c0_46] : memref<1x128xf32, #tpu.memory_space<vmem>>, vector<1x128xf32>
    %c0_47 = arith.constant 0 : index
    %c0_48 = arith.constant 0 : index
    %102 = vector.load %arg13[%c0_47, %c0_48] : memref<1x128xf32, #tpu.memory_space<vmem>>, vector<1x128xf32>
    %cst_49 = arith.constant dense<0.000000e+00> : vector<8xf32>
    %103 = vector.multi_reduction <add>, %100, %cst_49 [1] : vector<8x128xf32> to vector<8xf32>
    %104 = vector.shape_cast %103 : vector<8xf32> to vector<8x1xf32>
    %cst_50 = arith.constant 1.280000e+02 : f32
    %105 = vector.broadcast %cst_50 : f32 to vector<8x1xf32>
    %106 = arith.divf %104, %105 : vector<8x1xf32>
    %107 = vector.broadcast %106 : vector<8x1xf32> to vector<8x128xf32>
    %108 = arith.subf %100, %107 : vector<8x128xf32>
    %109 = arith.mulf %108, %108 : vector<8x128xf32>
    %cst_51 = arith.constant dense<0.000000e+00> : vector<8xf32>
    %110 = vector.multi_reduction <add>, %109, %cst_51 [1] : vector<8x128xf32> to vector<8xf32>
    %111 = vector.shape_cast %110 : vector<8xf32> to vector<8x1xf32>
    %cst_52 = arith.constant 1.280000e+02 : f32
    %112 = vector.broadcast %cst_52 : f32 to vector<8x1xf32>
    %113 = arith.divf %111, %112 : vector<8x1xf32>
    %cst_53 = arith.constant 9.99999974E-6 : f32
    %114 = vector.broadcast %cst_53 : f32 to vector<8x1xf32>
    %115 = arith.addf %113, %114 : vector<8x1xf32>
    %116 = math.rsqrt %115 : vector<8x1xf32>
    %117 = vector.broadcast %116 : vector<8x1xf32> to vector<8x128xf32>
    %118 = arith.mulf %108, %117 : vector<8x128xf32>
    %119 = vector.broadcast %101 : vector<1x128xf32> to vector<8x128xf32>
    %120 = arith.mulf %118, %119 : vector<8x128xf32>
    %121 = vector.broadcast %102 : vector<1x128xf32> to vector<8x128xf32>
    %122 = arith.addf %120, %121 : vector<8x128xf32>
    %123 = arith.truncf %122 : vector<8x128xf32> to vector<8x128xbf16>
    %c0_54 = arith.constant 0 : index
    %c0_55 = arith.constant 0 : index
    %124 = vector.load %arg14[%c0_54, %c0_55] : memref<128x256xbf16, #tpu.memory_space<vmem>>, vector<128x256xbf16>
    %cst_56 = arith.constant dense<0.000000e+00> : vector<8x256xf32>
    %125 = tpu.matmul %123, %124, %cst_56 {dimension_numbers = #tpu.dot_dimension_numbers<[1], [0], [0], [1], [0, 0, 1, 1], [], []>} : vector<8x128xbf16>, vector<128x256xbf16>, vector<8x256xf32> -> vector<8x256xf32>
    %c0_57 = arith.constant 0 : index
    %c0_58 = arith.constant 0 : index
    %126 = vector.load %arg15[%c0_57, %c0_58] : memref<1x256xf32, #tpu.memory_space<vmem>>, vector<1x256xf32>
    %127 = vector.broadcast %126 : vector<1x256xf32> to vector<8x256xf32>
    %128 = arith.addf %125, %127 : vector<8x256xf32>
    %cst_59 = arith.constant 0.000000e+00 : f32
    %129 = vector.broadcast %cst_59 : f32 to vector<8x256xf32>
    %130 = arith.maximumf %128, %129 : vector<8x256xf32>
    %131 = arith.truncf %130 : vector<8x256xf32> to vector<8x256xbf16>
    %c0_60 = arith.constant 0 : index
    %c0_61 = arith.constant 0 : index
    %132 = vector.load %arg16[%c0_60, %c0_61] : memref<256x128xbf16, #tpu.memory_space<vmem>>, vector<256x128xbf16>
    %cst_62 = arith.constant dense<0.000000e+00> : vector<8x128xf32>
    %133 = tpu.matmul %131, %132, %cst_62 {dimension_numbers = #tpu.dot_dimension_numbers<[1], [0], [0], [1], [0, 0, 1, 1], [], []>} : vector<8x256xbf16>, vector<256x128xbf16>, vector<8x128xf32> -> vector<8x128xf32>
    %c0_63 = arith.constant 0 : index
    %c0_64 = arith.constant 0 : index
    %134 = vector.load %arg17[%c0_63, %c0_64] : memref<1x128xf32, #tpu.memory_space<vmem>>, vector<1x128xf32>
    %135 = vector.broadcast %134 : vector<1x128xf32> to vector<8x128xf32>
    %136 = arith.addf %133, %135 : vector<8x128xf32>
    %137 = arith.addf %136, %122 : vector<8x128xf32>
    %c0_65 = arith.constant 0 : index
    %c0_66 = arith.constant 0 : index
    %138 = vector.load %arg18[%c0_65, %c0_66] : memref<1x128xf32, #tpu.memory_space<vmem>>, vector<1x128xf32>
    %c0_67 = arith.constant 0 : index
    %c0_68 = arith.constant 0 : index
    %139 = vector.load %arg19[%c0_67, %c0_68] : memref<1x128xf32, #tpu.memory_space<vmem>>, vector<1x128xf32>
    %cst_69 = arith.constant dense<0.000000e+00> : vector<8xf32>
    %140 = vector.multi_reduction <add>, %137, %cst_69 [1] : vector<8x128xf32> to vector<8xf32>
    %141 = vector.shape_cast %140 : vector<8xf32> to vector<8x1xf32>
    %cst_70 = arith.constant 1.280000e+02 : f32
    %142 = vector.broadcast %cst_70 : f32 to vector<8x1xf32>
    %143 = arith.divf %141, %142 : vector<8x1xf32>
    %144 = vector.broadcast %143 : vector<8x1xf32> to vector<8x128xf32>
    %145 = arith.subf %137, %144 : vector<8x128xf32>
    %146 = arith.mulf %145, %145 : vector<8x128xf32>
    %cst_71 = arith.constant dense<0.000000e+00> : vector<8xf32>
    %147 = vector.multi_reduction <add>, %146, %cst_71 [1] : vector<8x128xf32> to vector<8xf32>
    %148 = vector.shape_cast %147 : vector<8xf32> to vector<8x1xf32>
    %cst_72 = arith.constant 1.280000e+02 : f32
    %149 = vector.broadcast %cst_72 : f32 to vector<8x1xf32>
    %150 = arith.divf %148, %149 : vector<8x1xf32>
    %cst_73 = arith.constant 9.99999974E-6 : f32
    %151 = vector.broadcast %cst_73 : f32 to vector<8x1xf32>
    %152 = arith.addf %150, %151 : vector<8x1xf32>
    %153 = math.rsqrt %152 : vector<8x1xf32>
    %154 = vector.broadcast %153 : vector<8x1xf32> to vector<8x128xf32>
    %155 = arith.mulf %145, %154 : vector<8x128xf32>
    %156 = vector.broadcast %138 : vector<1x128xf32> to vector<8x128xf32>
    %157 = arith.mulf %155, %156 : vector<8x128xf32>
    %158 = vector.broadcast %139 : vector<1x128xf32> to vector<8x128xf32>
    %159 = arith.addf %157, %158 : vector<8x128xf32>
    %c0_74 = arith.constant 0 : index
    %c0_75 = arith.constant 0 : index
    %160 = vector.load %arg20[%c0_74, %c0_75] : memref<8x128xf32, #tpu.memory_space<vmem>>, vector<8x128xf32>
    tpu.vector_store %arg20[%c0_74, %c0_75], %159 {strides = array<i32>} : memref<8x128xf32, #tpu.memory_space<vmem>>, vector<8x128xf32>,
    return
  }
  func.func @transform_0(%arg0: i32) -> (i32, i32) {
    %c0_i32 = arith.constant 0 : i32
    %c0_i32_0 = arith.constant 0 : i32
    return %arg0, %c0_i32 : i32, i32
  }
  func.func @transform_1(%arg0: i32) -> (i32, i32) {
    %c0_i32 = arith.constant 0 : i32
    %c0_i32_0 = arith.constant 0 : i32
    return %arg0, %c0_i32 : i32, i32
  }
  func.func @transform_2(%arg0: i32) -> (i32, i32, i32) {
    %c0_i32 = arith.constant 0 : i32
    %c0_i32_0 = arith.constant 0 : i32
    %c0_i32_1 = arith.constant 0 : i32
    return %arg0, %c0_i32, %c0_i32_0 : i32, i32, i32
  }
  func.func @transform_3(%arg0: i32) -> (i32, i32) {
    %c0_i32 = arith.constant 0 : i32
    %c0_i32_0 = arith.constant 0 : i32
    %c0_i32_1 = arith.constant 0 : i32
    return %c0_i32, %c0_i32_0 : i32, i32
  }
  func.func @transform_4(%arg0: i32) -> (i32, i32) {
    %c0_i32 = arith.constant 0 : i32
    %c0_i32_0 = arith.constant 0 : i32
    %c0_i32_1 = arith.constant 0 : i32
    return %c0_i32, %c0_i32_0 : i32, i32
  }
  func.func @transform_5(%arg0: i32) -> (i32, i32) {
    %c0_i32 = arith.constant 0 : i32
    %c0_i32_0 = arith.constant 0 : i32
    %c0_i32_1 = arith.constant 0 : i32
    return %c0_i32, %c0_i32_0 : i32, i32
  }
  func.func @transform_6(%arg0: i32) -> (i32, i32) {
    %c0_i32 = arith.constant 0 : i32
    %c0_i32_0 = arith.constant 0 : i32
    %c0_i32_1 = arith.constant 0 : i32
    return %c0_i32, %c0_i32_0 : i32, i32
  }
  func.func @transform_7(%arg0: i32) -> (i32, i32) {
    %c0_i32 = arith.constant 0 : i32
    %c0_i32_0 = arith.constant 0 : i32
    %c0_i32_1 = arith.constant 0 : i32
    return %c0_i32, %c0_i32_0 : i32, i32
  }
  func.func @transform_8(%arg0: i32) -> (i32, i32) {
    %c0_i32 = arith.constant 0 : i32
    %c0_i32_0 = arith.constant 0 : i32
    %c0_i32_1 = arith.constant 0 : i32
    return %c0_i32, %c0_i32_0 : i32, i32
  }
  func.func @transform_9(%arg0: i32) -> (i32, i32) {
    %c0_i32 = arith.constant 0 : i32
    %c0_i32_0 = arith.constant 0 : i32
    %c0_i32_1 = arith.constant 0 : i32
    return %c0_i32, %c0_i32_0 : i32, i32
  }
  func.func @transform_10(%arg0: i32) -> (i32, i32) {
    %c0_i32 = arith.constant 0 : i32
    %c0_i32_0 = arith.constant 0 : i32
    %c0_i32_1 = arith.constant 0 : i32
    return %c0_i32, %c0_i32_0 : i32, i32
  }
  func.func @transform_11(%arg0: i32) -> (i32, i32) {
    %c0_i32 = arith.constant 0 : i32
    %c0_i32_0 = arith.constant 0 : i32
    %c0_i32_1 = arith.constant 0 : i32
    return %c0_i32, %c0_i32_0 : i32, i32
  }
  func.func @transform_12(%arg0: i32) -> (i32, i32) {
    %c0_i32 = arith.constant 0 : i32
    %c0_i32_0 = arith.constant 0 : i32
    %c0_i32_1 = arith.constant 0 : i32
    return %c0_i32, %c0_i32_0 : i32, i32
  }
  func.func @transform_13(%arg0: i32) -> (i32, i32) {
    %c0_i32 = arith.constant 0 : i32
    %c0_i32_0 = arith.constant 0 : i32
    %c0_i32_1 = arith.constant 0 : i32
    return %c0_i32, %c0_i32_0 : i32, i32
  }
  func.func @transform_14(%arg0: i32) -> (i32, i32) {
    %c0_i32 = arith.constant 0 : i32
    %c0_i32_0 = arith.constant 0 : i32
    %c0_i32_1 = arith.constant 0 : i32
    return %c0_i32, %c0_i32_0 : i32, i32
  }
  func.func @transform_15(%arg0: i32) -> (i32, i32) {
    %c0_i32 = arith.constant 0 : i32
    %c0_i32_0 = arith.constant 0 : i32
    %c0_i32_1 = arith.constant 0 : i32
    return %c0_i32, %c0_i32_0 : i32, i32
  }
  func.func @transform_16(%arg0: i32) -> (i32, i32) {
    %c0_i32 = arith.constant 0 : i32
    %c0_i32_0 = arith.constant 0 : i32
    %c0_i32_1 = arith.constant 0 : i32
    return %c0_i32, %c0_i32_0 : i32, i32
  }
  func.func @transform_17(%arg0: i32) -> (i32, i32) {
    %c0_i32 = arith.constant 0 : i32
    %c0_i32_0 = arith.constant 0 : i32
    %c0_i32_1 = arith.constant 0 : i32
    return %c0_i32, %c0_i32_0 : i32, i32
  }
  func.func @transform_18(%arg0: i32) -> (i32, i32) {
    %c0_i32 = arith.constant 0 : i32
    %c0_i32_0 = arith.constant 0 : i32
    %c0_i32_1 = arith.constant 0 : i32
    return %c0_i32, %c0_i32_0 : i32, i32
  }
  func.func @transform_19(%arg0: i32) -> (i32, i32) {
    %c0_i32 = arith.constant 0 : i32
    %c0_i32_0 = arith.constant 0 : i32
    return %arg0, %c0_i32 : i32, i32
  }
}

</mosaic_0001>

<llo_original>
// kernel: tpu_custom_call.1
$region0: #{tpu_custom_call.1}
  #allocation0 [shape = 'u32[]', space=smem, size = 0x4, offset = 0x4, fixed_abs, tag = 'smem constant byte address 0x4 - core index']
  #allocation1 [shape = 'u32[72,128]{1,0:T(1,128)}', space=vmem, size = 0x9000, scoped, tag = 'internal scratch']
  %s0 = inlined_call_operand.hbm [shape: f32[16,128], index: 0, kind: input, shape index: {}]
  %s1 = inlined_call_operand.hbm [shape: f32[32,128], index: 1, kind: input, shape index: {}]
  %s2 = inlined_call_operand.hbm [shape: s32[2,1,16], index: 2, kind: input, shape index: {}]
  %s3 = inlined_call_operand.hbm [shape: bf16[128,128], index: 3, kind: input, shape index: {}]
  %s4 = inlined_call_operand.vmem [shape: f32[1,128], index: 4, kind: input, shape index: {}]
  %s5 = inlined_call_operand.hbm [shape: bf16[128,128], index: 5, kind: input, shape index: {}]
  %s6 = inlined_call_operand.vmem [shape: f32[1,128], index: 6, kind: input, shape index: {}]
  %s7 = inlined_call_operand.hbm [shape: bf16[128,128], index: 7, kind: input, shape index: {}]
  %s8 = inlined_call_operand.vmem [shape: f32[1,128], index: 8, kind: input, shape index: {}]
  %s9 = inlined_call_operand.hbm [shape: bf16[128,128], index: 9, kind: input, shape index: {}]
  %s10 = inlined_call_operand.vmem [shape: f32[1,128], index: 10, kind: input, shape index: {}]
  %s11 = inlined_call_operand.vmem [shape: f32[1,128], index: 11, kind: input, shape index: {}]
  %s12 = inlined_call_operand.vmem [shape: f32[1,128], index: 12, kind: input, shape index: {}]
  %s13 = inlined_call_operand.hbm [shape: bf16[128,256], index: 13, kind: input, shape index: {}]
  %s14 = inlined_call_operand.vmem [shape: f32[1,256], index: 14, kind: input, shape index: {}]
  %s15 = inlined_call_operand.hbm [shape: bf16[256,128], index: 15, kind: input, shape index: {}]
  %s16 = inlined_call_operand.vmem [shape: f32[1,128], index: 16, kind: input, shape index: {}]
  %s17 = inlined_call_operand.vmem [shape: f32[1,128], index: 17, kind: input, shape index: {}]
  %s18 = inlined_call_operand.vmem [shape: f32[1,128], index: 18, kind: input, shape index: {}]
  %s19 = inlined_call_operand.hbm [shape: f32[16,128], index: 19, kind: output, shape index: {}]
  %s20 = sld [smem:[#allocation0]]
  $region145: #{tpu_custom_call.1} parent=0
    _
  %s22 = ssub.s32 1, %s20
  %s23 = scalar_select 0, %s22, %s20
  $region1: #{tpu_custom_call.1} parent=0
    #allocation2 [shape = 'u8[8192]{0}', space=vmem, size = 0x2000, scoped, tag = 'input window, operand 0']
    #allocation3 [shape = 's32[2]{0}', space=sflag, size = 0x8, scoped, tag = 'scoped memory for tpu_custom_call.1']
    #allocation4 [shape = 's32[2]{0}', space=sflag, size = 0x8, scoped, tag = 'scoped memory for tpu_custom_call.1']
    #allocation5 [shape = 'u8[16384]{0}', space=vmem, size = 0x4000, scoped, tag = 'input window, operand 1']
    #allocation6 [shape = 's32[2]{0}', space=sflag, size = 0x8, scoped, tag = 'scoped memory for tpu_custom_call.1']
    #allocation7 [shape = 'u8[1024]{0}', space=vmem, size = 0x400, scoped, tag = 'input window, operand 2']
    #allocation8 [shape = 'u8[32768]{0}', space=vmem, size = 0x8000, scoped, tag = 'input window, operand 3, single buffered']
    #allocation9 [shape = 's32[1]{0}', space=sflag, size = 0x4, scoped, tag = 'scoped memory for tpu_custom_call.1']
    #allocation10 [shape = 'u8[32768]{0}', space=vmem, size = 0x8000, scoped, tag = 'input window, operand 5, single buffered']
    #allocation11 [shape = 'u8[32768]{0}', space=vmem, size = 0x8000, scoped, tag = 'input window, operand 7, single buffered']
    #allocation12 [shape = 's32[1]{0}', space=sflag, size = 0x4, scoped, tag = 'scoped memory for tpu_custom_call.1']
    #allocation13 [shape = 'u8[32768]{0}', space=vmem, size = 0x8000, scoped, tag = 'input window, operand 9, single buffered']
    #allocation14 [shape = 'u8[65536]{0}', space=vmem, size = 0x10000, scoped, tag = 'input window, operand 13, single buffered']
    #allocation15 [shape = 's32[1]{0}', space=sflag, size = 0x4, scoped, tag = 'scoped memory for tpu_custom_call.1']
    #allocation16 [shape = 'u8[65536]{0}', space=vmem, size = 0x10000, scoped, tag = 'input window, operand 15, single buffered']
    #allocation17 [shape = 'u8[8192]{0}', space=vmem, size = 0x2000, scoped, tag = 'output window, operand 0']
    %24 = vsyncpa [#allocation3], 0
    %s25 = scalar_lea.sflag [#allocation3], 1
    %26 = vsyncpa %s25, 0
    %27 = vsyncpa [#allocation6], 0
    %s28 = scalar_lea.sflag [#allocation6], 1
    %29 = vsyncpa %s28, 0
    %30 = vsyncpa [#allocation9], 0
    %31 = vsyncpa [#allocation12], 0
    %32 = vsyncpa [#allocation15], 0
    %33 = vsyncpa [#allocation4], 0
    %s34 = scalar_lea.sflag [#allocation4], 1
    %35 = vsyncpa %s34, 0
    loop: start=0, step=1, limit=4
    $region2: #{tpu_custom_call.1} parent=1 // loop_pre_header
      _
    $region3: #{tpu_custom_call.1} parent=1 // loop_header
      %s37 = sphi 0, %s41
      %p38 = scmp.ge.s32.totalorder %s37, 4
      %s47 = sphi 0, %s49
      %s50 = sphi 0, %s47
      %s51 = sphi 0, %s50
      %s67 = sphi 0, %s51
      %s73 = sphi 0, %s75
      %s76 = sphi 0, %s73
      %s77 = sphi 0, %s76
      %s93 = sphi 0, %s77
      %s99 = sphi 0, %s101
      %s102 = sphi 0, %s99
      %s103 = sphi 0, %s102
      %s119 = sphi 0, %s103
      %s123 = sphi 0, %s123
      %s125 = sphi 0, %s123
      %s126 = sphi 0, %s125
      %s140 = sphi 0, %s126
      %s144 = sphi 0, %s144
      %s146 = sphi 0, %s144
      %s147 = sphi 0, %s146
      %s161 = sphi 0, %s147
      %s165 = sphi 0, %s165
      %s167 = sphi 0, %s165
      %s168 = sphi 0, %s167
      %s182 = sphi 0, %s168
      %s186 = sphi 0, %s186
      %s188 = sphi 0, %s186
      %s189 = sphi 0, %s188
      %s203 = sphi 0, %s189
      %s207 = sphi 0, %s207
      %s209 = sphi 0, %s207
      %s210 = sphi 0, %s209
      %s224 = sphi 0, %s210
      %s228 = sphi 0, %s228
      %s230 = sphi 0, %s228
      %s231 = sphi 0, %s230
      %s245 = sphi 0, %s231
      %s249 = sphi 0, %s249
      %s251 = sphi 0, %s249
      %s252 = sphi 0, %s251
      %s266 = sphi 0, %s252
      %s270 = sphi 0, %s270
      %s272 = sphi 0, %s270
      %s273 = sphi 0, %s272
      %s287 = sphi 0, %s273
      %s291 = sphi 0, %s291
      %s293 = sphi 0, %s291
      %s294 = sphi 0, %s293
      %s308 = sphi 0, %s294
      %s312 = sphi 0, %s312
      %s314 = sphi 0, %s312
      %s315 = sphi 0, %s314
      %s329 = sphi 0, %s315
      %s333 = sphi 0, %s333
      %s335 = sphi 0, %s333
      %s336 = sphi 0, %s335
      %s350 = sphi 0, %s336
      %s354 = sphi 0, %s354
      %s356 = sphi 0, %s354
      %s357 = sphi 0, %s356
      %s371 = sphi 0, %s357
      %s375 = sphi 0, %s375
      %s377 = sphi 0, %s375
      %s378 = sphi 0, %s377
      %s392 = sphi 0, %s378
      %s396 = sphi 0, %s396
      %s398 = sphi 0, %s396
      %s399 = sphi 0, %s398
      %s413 = sphi 0, %s399
      %s417 = sphi 0, %s417
      %s419 = sphi 0, %s417
      %s420 = sphi 0, %s419
      %s434 = sphi 0, %s420
      %s438 = sphi 0, %s438
      %s440 = sphi 0, %s438
      %s441 = sphi 0, %s440
      %s455 = sphi 0, %s441
      %s461 = sphi 0, %s463
      %s464 = sphi 0, %s461
      %s465 = sphi 0, %s464
      %s481 = sphi 0, %s465
    $region4: #{tpu_custom_call.1} parent=1 // loop_header_branch
      %40 = sbr.rel (%p38) target = $region8
    $region5: #{tpu_custom_call.1} parent=1 // loop_body
      %s42 = ssub.s32 %s37, 1
      %s43 = ssub.s32 %s37, 2
      %s44 = sadd.s32 %s37, 1
      %s45 = ssub.s32 %s37, %s44
      %p46 = scmp.eq.s32.totalorder %s45, 0
      %s48 = sadd.s32 %s47, 1
      %s49 = scalar_select %p46, %s47, %s48
      %p52 = pneg %p46
      %p53 = scmp.eq.s32.totalorder %s37, 1
      %p54 = por %p52, %p53
      %p55 = scmp.ne.s32.totalorder %s47, %s50
      %p56 = scmp.eq.s32.totalorder %s37, 0
      %p57 = por %p55, %p56
      %p58 = scmp.ne.s32.totalorder %s47, %s50
      %p59 = scmp.eq.s32.totalorder %s42, 1
      %p60 = por %p58, %p59
      %p61 = scmp.ne.s32.totalorder %s50, %s51
      %p62 = scmp.eq.s32.totalorder %s42, 0
      %p63 = por %p61, %p62
      %p64 = scmp.ne.s32.totalorder %s50, %s51
      %p65 = scmp.eq.s32.totalorder %s43, 1
      %p66 = por %p64, %p65
      %p68 = scmp.ne.s32.totalorder %s51, %s67
      %p69 = scmp.eq.s32.totalorder %s43, 0
      %p70 = por %p68, %p69
      %s71 = ssub.s32 %s37, %s44
      %p72 = scmp.eq.s32.totalorder %s71, 0
      %s74 = sadd.s32 %s73, 1
      %s75 = scalar_select %p72, %s73, %s74
      %p78 = pneg %p72
      %p79 = scmp.eq.s32.totalorder %s37, 1
      %p80 = por %p78, %p79
      %p81 = scmp.ne.s32.totalorder %s73, %s76
      %p82 = scmp.eq.s32.totalorder %s37, 0
      %p83 = por %p81, %p82
      %p84 = scmp.ne.s32.totalorder %s73, %s76
      %p85 = scmp.eq.s32.totalorder %s42, 1
      %p86 = por %p84, %p85
      %p87 = scmp.ne.s32.totalorder %s76, %s77
      %p88 = scmp.eq.s32.totalorder %s42, 0
      %p89 = por %p87, %p88
      %p90 = scmp.ne.s32.totalorder %s76, %s77
      %p91 = scmp.eq.s32.totalorder %s43, 1
      %p92 = por %p90, %p91
      %p94 = scmp.ne.s32.totalorder %s77, %s93
      %p95 = scmp.eq.s32.totalorder %s43, 0
      %p96 = por %p94, %p95
      %s97 = ssub.s32 %s37, %s44
      %p98 = scmp.eq.s32.totalorder %s97, 0
      %s100 = sadd.s32 %s99, 1
      %s101 = scalar_select %p98, %s99, %s100
      %p104 = pneg %p98
      %p105 = scmp.eq.s32.totalorder %s37, 1
      %p106 = por %p104, %p105
      %p107 = scmp.ne.s32.totalorder %s99, %s102
      %p108 = scmp.eq.s32.totalorder %s37, 0
      %p109 = por %p107, %p108
      %p110 = scmp.ne.s32.totalorder %s99, %s102
      %p111 = scmp.eq.s32.totalorder %s42, 1
      %p112 = por %p110, %p111
      %p113 = scmp.ne.s32.totalorder %s102, %s103
      %p114 = scmp.eq.s32.totalorder %s42, 0
      %p115 = por %p113, %p114
      %p116 = scmp.ne.s32.totalorder %s102, %s103
      %p117 = scmp.eq.s32.totalorder %s43, 1
      %p118 = por %p116, %p117
      %p120 = scmp.ne.s32.totalorder %s103, %s119
      %p121 = scmp.eq.s32.totalorder %s43, 0
      %p122 = por %p120, %p121
      %s124 = sadd.s32 %s123, 1
      %p127 = scmp.eq.s32.totalorder %s37, 1
      %p128 = scmp.ne.s32.totalorder %s123, %s125
      %p129 = scmp.eq.s32.totalorder %s37, 0
      %p130 = por %p128, %p129
      %p131 = scmp.ne.s32.totalorder %s123, %s125
      %p132 = scmp.eq.s32.totalorder %s42, 1
      %p133 = por %p131, %p132
      %p134 = scmp.ne.s32.totalorder %s125, %s126
      %p135 = scmp.eq.s32.totalorder %s42, 0
      %p136 = por %p134, %p135
      %p137 = scmp.ne.s32.totalorder %s125, %s126
      %p138 = scmp.eq.s32.totalorder %s43, 1
      %p139 = por %p137, %p138
      %p141 = scmp.ne.s32.totalorder %s126, %s140
      %p142 = scmp.eq.s32.totalorder %s43, 0
      %p143 = por %p141, %p142
      %s145 = sadd.s32 %s144, 1
      %p148 = scmp.eq.s32.totalorder %s37, 1
      %p149 = scmp.ne.s32.totalorder %s144, %s146
      %p150 = scmp.eq.s32.totalorder %s37, 0
      %p151 = por %p149, %p150
      %p152 = scmp.ne.s32.totalorder %s144, %s146
      %p153 = scmp.eq.s32.totalorder %s42, 1
      %p154 = por %p152, %p153
      %p155 = scmp.ne.s32.totalorder %s146, %s147
      %p156 = scmp.eq.s32.totalorder %s42, 0
      %p157 = por %p155, %p156
      %p158 = scmp.ne.s32.totalorder %s146, %s147
      %p159 = scmp.eq.s32.totalorder %s43, 1
      %p160 = por %p158, %p159
      %p162 = scmp.ne.s32.totalorder %s147, %s161
      %p163 = scmp.eq.s32.totalorder %s43, 0
      %p164 = por %p162, %p163
      %s166 = sadd.s32 %s165, 1
      %p169 = scmp.eq.s32.totalorder %s37, 1
      %p170 = scmp.ne.s32.totalorder %s165, %s167
      %p171 = scmp.eq.s32.totalorder %s37, 0
      %p172 = por %p170, %p171
      %p173 = scmp.ne.s32.totalorder %s165, %s167
      %p174 = scmp.eq.s32.totalorder %s42, 1
      %p175 = por %p173, %p174
      %p176 = scmp.ne.s32.totalorder %s167, %s168
      %p177 = scmp.eq.s32.totalorder %s42, 0
      %p178 = por %p176, %p177
      %p179 = scmp.ne.s32.totalorder %s167, %s168
      %p180 = scmp.eq.s32.totalorder %s43, 1
      %p181 = por %p179, %p180
      %p183 = scmp.ne.s32.totalorder %s168, %s182
      %p184 = scmp.eq.s32.totalorder %s43, 0
      %p185 = por %p183, %p184
      %s187 = sadd.s32 %s186, 1
      %p190 = scmp.eq.s32.totalorder %s37, 1
      %p191 = scmp.ne.s32.totalorder %s186, %s188
      %p192 = scmp.eq.s32.totalorder %s37, 0
      %p193 = por %p191, %p192
      %p194 = scmp.ne.s32.totalorder %s186, %s188
      %p195 = scmp.eq.s32.totalorder %s42, 1
      %p196 = por %p194, %p195
      %p197 = scmp.ne.s32.totalorder %s188, %s189
      %p198 = scmp.eq.s32.totalorder %s42, 0
      %p199 = por %p197, %p198
      %p200 = scmp.ne.s32.totalorder %s188, %s189
      %p201 = scmp.eq.s32.totalorder %s43, 1
      %p202 = por %p200, %p201
      %p204 = scmp.ne.s32.totalorder %s189, %s203
      %p205 = scmp.eq.s32.totalorder %s43, 0
      %p206 = por %p204, %p205
      %s208 = sadd.s32 %s207, 1
      %p211 = scmp.eq.s32.totalorder %s37, 1
      %p212 = scmp.ne.s32.totalorder %s207, %s209
      %p213 = scmp.eq.s32.totalorder %s37, 0
      %p214 = por %p212, %p213
      %p215 = scmp.ne.s32.totalorder %s207, %s209
      %p216 = scmp.eq.s32.totalorder %s42, 1
      %p217 = por %p215, %p216
      %p218 = scmp.ne.s32.totalorder %s209, %s210
      %p219 = scmp.eq.s32.totalorder %s42, 0
      %p220 = por %p218, %p219
      %p221 = scmp.ne.s32.totalorder %s209, %s210
      %p222 = scmp.eq.s32.totalorder %s43, 1
      %p223 = por %p221, %p222
      %p225 = scmp.ne.s32.totalorder %s210, %s224
      %p226 = scmp.eq.s32.totalorder %s43, 0
      %p227 = por %p225, %p226
      %s229 = sadd.s32 %s228, 1
      %p232 = scmp.eq.s32.totalorder %s37, 1
      %p233 = scmp.ne.s32.totalorder %s228, %s230
      %p234 = scmp.eq.s32.totalorder %s37, 0
      %p235 = por %p233, %p234
      %p236 = scmp.ne.s32.totalorder %s228, %s230
      %p237 = scmp.eq.s32.totalorder %s42, 1
      %p238 = por %p236, %p237
      %p239 = scmp.ne.s32.totalorder %s230, %s231
      %p240 = scmp.eq.s32.totalorder %s42, 0
      %p241 = por %p239, %p240
      %p242 = scmp.ne.s32.totalorder %s230, %s231
      %p243 = scmp.eq.s32.totalorder %s43, 1
      %p244 = por %p242, %p243
      %p246 = scmp.ne.s32.totalorder %s231, %s245
      %p247 = scmp.eq.s32.totalorder %s43, 0
      %p248 = por %p246, %p247
      %s250 = sadd.s32 %s249, 1
      %p253 = scmp.eq.s32.totalorder %s37, 1
      %p254 = scmp.ne.s32.totalorder %s249, %s251
      %p255 = scmp.eq.s32.totalorder %s37, 0
      %p256 = por %p254, %p255
      %p257 = scmp.ne.s32.totalorder %s249, %s251
      %p258 = scmp.eq.s32.totalorder %s42, 1
      %p259 = por %p257, %p258
      %p260 = scmp.ne.s32.totalorder %s251, %s252
      %p261 = scmp.eq.s32.totalorder %s42, 0
      %p262 = por %p260, %p261
      %p263 = scmp.ne.s32.totalorder %s251, %s252
      %p264 = scmp.eq.s32.totalorder %s43, 1
      %p265 = por %p263, %p264
      %p267 = scmp.ne.s32.totalorder %s252, %s266
      %p268 = scmp.eq.s32.totalorder %s43, 0
      %p269 = por %p267, %p268
      %s271 = sadd.s32 %s270, 1
      %p274 = scmp.eq.s32.totalorder %s37, 1
      %p275 = scmp.ne.s32.totalorder %s270, %s272
      %p276 = scmp.eq.s32.totalorder %s37, 0
      %p277 = por %p275, %p276
      %p278 = scmp.ne.s32.totalorder %s270, %s272
      %p279 = scmp.eq.s32.totalorder %s42, 1
      %p280 = por %p278, %p279
      %p281 = scmp.ne.s32.totalorder %s272, %s273
      %p282 = scmp.eq.s32.totalorder %s42, 0
      %p283 = por %p281, %p282
      %p284 = scmp.ne.s32.totalorder %s272, %s273
      %p285 = scmp.eq.s32.totalorder %s43, 1
      %p286 = por %p284, %p285
      %p288 = scmp.ne.s32.totalorder %s273, %s287
      %p289 = scmp.eq.s32.totalorder %s43, 0
      %p290 = por %p288, %p289
      %s292 = sadd.s32 %s291, 1
      %p295 = scmp.eq.s32.totalorder %s37, 1
      %p296 = scmp.ne.s32.totalorder %s291, %s293
      %p297 = scmp.eq.s32.totalorder %s37, 0
      %p298 = por %p296, %p297
      %p299 = scmp.ne.s32.totalorder %s291, %s293
      %p300 = scmp.eq.s32.totalorder %s42, 1
      %p301 = por %p299, %p300
      %p302 = scmp.ne.s32.totalorder %s293, %s294
      %p303 = scmp.eq.s32.totalorder %s42, 0
      %p304 = por %p302, %p303
      %p305 = scmp.ne.s32.totalorder %s293, %s294
      %p306 = scmp.eq.s32.totalorder %s43, 1
      %p307 = por %p305, %p306
      %p309 = scmp.ne.s32.totalorder %s294, %s308
      %p310 = scmp.eq.s32.totalorder %s43, 0
      %p311 = por %p309, %p310
      %s313 = sadd.s32 %s312, 1
      %p316 = scmp.eq.s32.totalorder %s37, 1
      %p317 = scmp.ne.s32.totalorder %s312, %s314
      %p318 = scmp.eq.s32.totalorder %s37, 0
      %p319 = por %p317, %p318
      %p320 = scmp.ne.s32.totalorder %s312, %s314
      %p321 = scmp.eq.s32.totalorder %s42, 1
      %p322 = por %p320, %p321
      %p323 = scmp.ne.s32.totalorder %s314, %s315
      %p324 = scmp.eq.s32.totalorder %s42, 0
      %p325 = por %p323, %p324
      %p326 = scmp.ne.s32.totalorder %s314, %s315
      %p327 = scmp.eq.s32.totalorder %s43, 1
      %p328 = por %p326, %p327
      %p330 = scmp.ne.s32.totalorder %s315, %s329
      %p331 = scmp.eq.s32.totalorder %s43, 0
      %p332 = por %p330, %p331
      %s334 = sadd.s32 %s333, 1
      %p337 = scmp.eq.s32.totalorder %s37, 1
      %p338 = scmp.ne.s32.totalorder %s333, %s335
      %p339 = scmp.eq.s32.totalorder %s37, 0
      %p340 = por %p338, %p339
      %p341 = scmp.ne.s32.totalorder %s333, %s335
      %p342 = scmp.eq.s32.totalorder %s42, 1
      %p343 = por %p341, %p342
      %p344 = scmp.ne.s32.totalorder %s335, %s336
      %p345 = scmp.eq.s32.totalorder %s42, 0
      %p346 = por %p344, %p345
      %p347 = scmp.ne.s32.totalorder %s335, %s336
      %p348 = scmp.eq.s32.totalorder %s43, 1
      %p349 = por %p347, %p348
      %p351 = scmp.ne.s32.totalorder %s336, %s350
      %p352 = scmp.eq.s32.totalorder %s43, 0
      %p353 = por %p351, %p352
      %s355 = sadd.s32 %s354, 1
      %p358 = scmp.eq.s32.totalorder %s37, 1
      %p359 = scmp.ne.s32.totalorder %s354, %s356
      %p360 = scmp.eq.s32.totalorder %s37, 0
      %p361 = por %p359, %p360
      %p362 = scmp.ne.s32.totalorder %s354, %s356
      %p363 = scmp.eq.s32.totalorder %s42, 1
      %p364 = por %p362, %p363
      %p365 = scmp.ne.s32.totalorder %s356, %s357
      %p366 = scmp.eq.s32.totalorder %s42, 0
      %p367 = por %p365, %p366
      %p368 = scmp.ne.s32.totalorder %s356, %s357
      %p369 = scmp.eq.s32.totalorder %s43, 1
      %p370 = por %p368, %p369
      %p372 = scmp.ne.s32.totalorder %s357, %s371
      %p373 = scmp.eq.s32.totalorder %s43, 0
      %p374 = por %p372, %p373
      %s376 = sadd.s32 %s375, 1
      %p379 = scmp.eq.s32.totalorder %s37, 1
      %p380 = scmp.ne.s32.totalorder %s375, %s377
      %p381 = scmp.eq.s32.totalorder %s37, 0
      %p382 = por %p380, %p381
      %p383 = scmp.ne.s32.totalorder %s375, %s377
      %p384 = scmp.eq.s32.totalorder %s42, 1
      %p385 = por %p383, %p384
      %p386 = scmp.ne.s32.totalorder %s377, %s378
      %p387 = scmp.eq.s32.totalorder %s42, 0
      %p388 = por %p386, %p387
      %p389 = scmp.ne.s32.totalorder %s377, %s378
      %p390 = scmp.eq.s32.totalorder %s43, 1
      %p391 = por %p389, %p390
      %p393 = scmp.ne.s32.totalorder %s378, %s392
      %p394 = scmp.eq.s32.totalorder %s43, 0
      %p395 = por %p393, %p394
      %s397 = sadd.s32 %s396, 1
      %p400 = scmp.eq.s32.totalorder %s37, 1
      %p401 = scmp.ne.s32.totalorder %s396, %s398
      %p402 = scmp.eq.s32.totalorder %s37, 0
      %p403 = por %p401, %p402
      %p404 = scmp.ne.s32.totalorder %s396, %s398
      %p405 = scmp.eq.s32.totalorder %s42, 1
      %p406 = por %p404, %p405
      %p407 = scmp.ne.s32.totalorder %s398, %s399
      %p408 = scmp.eq.s32.totalorder %s42, 0
      %p409 = por %p407, %p408
      %p410 = scmp.ne.s32.totalorder %s398, %s399
      %p411 = scmp.eq.s32.totalorder %s43, 1
      %p412 = por %p410, %p411
      %p414 = scmp.ne.s32.totalorder %s399, %s413
      %p415 = scmp.eq.s32.totalorder %s43, 0
      %p416 = por %p414, %p415
      %s418 = sadd.s32 %s417, 1
      %p421 = scmp.eq.s32.totalorder %s37, 1
      %p422 = scmp.ne.s32.totalorder %s417, %s419
      %p423 = scmp.eq.s32.totalorder %s37, 0
      %p424 = por %p422, %p423
      %p425 = scmp.ne.s32.totalorder %s417, %s419
      %p426 = scmp.eq.s32.totalorder %s42, 1
      %p427 = por %p425, %p426
      %p428 = scmp.ne.s32.totalorder %s419, %s420
      %p429 = scmp.eq.s32.totalorder %s42, 0
      %p430 = por %p428, %p429
      %p431 = scmp.ne.s32.totalorder %s419, %s420
      %p432 = scmp.eq.s32.totalorder %s43, 1
      %p433 = por %p431, %p432
      %p435 = scmp.ne.s32.totalorder %s420, %s434
      %p436 = scmp.eq.s32.totalorder %s43, 0
      %p437 = por %p435, %p436
      %s439 = sadd.s32 %s438, 1
      %p442 = scmp.eq.s32.totalorder %s37, 1
      %p443 = scmp.ne.s32.totalorder %s438, %s440
      %p444 = scmp.eq.s32.totalorder %s37, 0
      %p445 = por %p443, %p444
      %p446 = scmp.ne.s32.totalorder %s438, %s440
      %p447 = scmp.eq.s32.totalorder %s42, 1
      %p448 = por %p446, %p447
      %p449 = scmp.ne.s32.totalorder %s440, %s441
      %p450 = scmp.eq.s32.totalorder %s42, 0
      %p451 = por %p449, %p450
      %p452 = scmp.ne.s32.totalorder %s440, %s441
      %p453 = scmp.eq.s32.totalorder %s43, 1
      %p454 = por %p452, %p453
      %p456 = scmp.ne.s32.totalorder %s441, %s455
      %p457 = scmp.eq.s32.totalorder %s43, 0
      %p458 = por %p456, %p457
      %s459 = ssub.s32 %s37, %s44
      %p460 = scmp.eq.s32.totalorder %s459, 0
      %s462 = sadd.s32 %s461, 1
      %s463 = scalar_select %p460, %s461, %s462
      %p466 = pneg %p460
      %p467 = scmp.eq.s32.totalorder %s37, 1
      %p468 = por %p466, %p467
      %p469 = scmp.ne.s32.totalorder %s461, %s464
      %p470 = scmp.eq.s32.totalorder %s37, 0
      %p471 = por %p469, %p470
      %p472 = scmp.ne.s32.totalorder %s461, %s464
      %p473 = scmp.eq.s32.totalorder %s42, 1
      %p474 = por %p472, %p473
      %p475 = scmp.ne.s32.totalorder %s464, %s465
      %p476 = scmp.eq.s32.totalorder %s42, 0
      %p477 = por %p475, %p476
      %p478 = scmp.ne.s32.totalorder %s464, %s465
      %p479 = scmp.eq.s32.totalorder %s43, 1
      %p480 = por %p478, %p479
      %p482 = scmp.ne.s32.totalorder %s465, %s481
      %p483 = scmp.eq.s32.totalorder %s43, 0
      %p484 = por %p482, %p483
      %p485 = scmp.le.s32.totalorder 1, %s37
      %p486 = scmp.lt.s32.totalorder %s37, 3
      %p487 = pnand %p485, %p486
      %p488 = pneg %p487
      // Predicated region
      $region9: #{tpu_custom_call.1} parent=5 // pred_check
        _
      $region10: #{tpu_custom_call.1} parent=5 // pred_check_branch
        %490 = sbr.rel (%p487) target = $region12
      $region11: #{tpu_custom_call.1} parent=5 // pred_region
        %s491 = ssub.s32 %s37, 1
        // Predicated region
        $region13: #{tpu_custom_call.1} parent=11 // pred_check
          %p492 = pneg %p136
        $region14: #{tpu_custom_call.1} parent=11 // pred_check_branch
          %494 = sbr.rel (%p492) target = $region16
        $region15: #{tpu_custom_call.1} parent=11 // pred_region
          %496 = vsyncadd [#allocation9], 0
          %s497 = sshll.u32 %s3, 4
          %s498 = int_to_ptr.hbm [resolvable:$true] %s497
          %s499 = sshll.u32 [#allocation8], 4
          %s500 = int_to_ptr.vmem [resolvable:$true] %s499
          %505 = dma.hbm_to_vmem [thread:$0]  %s498, 1024, %s500, [#allocation9], 64, 64, 4
        $region16: #{tpu_custom_call.1} parent=11 // pred_fallthru
          _
        // Predicated region
        $region17: #{tpu_custom_call.1} parent=11 // pred_check
          %p506 = pneg %p157
        $region18: #{tpu_custom_call.1} parent=11 // pred_check_branch
          %508 = sbr.rel (%p506) target = $region20
        $region19: #{tpu_custom_call.1} parent=11 // pred_region
          _
        $region20: #{tpu_custom_call.1} parent=11 // pred_fallthru
          _
        // Predicated region
        $region21: #{tpu_custom_call.1} parent=11 // pred_check
          %p509 = pneg %p178
        $region22: #{tpu_custom_call.1} parent=11 // pred_check_branch
          %511 = sbr.rel (%p509) target = $region24
        $region23: #{tpu_custom_call.1} parent=11 // pred_region
          %513 = vsyncadd [#allocation9], 0
          %s514 = sshll.u32 %s5, 4
          %s515 = int_to_ptr.hbm [resolvable:$true] %s514
          %s516 = sshll.u32 [#allocation10], 4
          %s517 = int_to_ptr.vmem [resolvable:$true] %s516
          %522 = dma.hbm_to_vmem [thread:$0]  %s515, 1024, %s517, [#allocation9], 64, 64, 4
        $region24: #{tpu_custom_call.1} parent=11 // pred_fallthru
          _
        // Predicated region
        $region25: #{tpu_custom_call.1} parent=11 // pred_check
          %p523 = pneg %p199
        $region26: #{tpu_custom_call.1} parent=11 // pred_check_branch
          %525 = sbr.rel (%p523) target = $region28
        $region27: #{tpu_custom_call.1} parent=11 // pred_region
          _
        $region28: #{tpu_custom_call.1} parent=11 // pred_fallthru
          _
        // Predicated region
        $region29: #{tpu_custom_call.1} parent=11 // pred_check
          %p526 = pneg %p220
        $region30: #{tpu_custom_call.1} parent=11 // pred_check_branch
          %528 = sbr.rel (%p526) target = $region32
        $region31: #{tpu_custom_call.1} parent=11 // pred_region
          %530 = vsyncadd [#allocation12], 0
          %s531 = sshll.u32 %s7, 4
          %s532 = int_to_ptr.hbm [resolvable:$true] %s531
          %s533 = sshll.u32 [#allocation11], 4
          %s534 = int_to_ptr.vmem [resolvable:$true] %s533
          %539 = dma.hbm_to_vmem [thread:$0]  %s532, 1024, %s534, [#allocation12], 64, 64, 4
        $region32: #{tpu_custom_call.1} parent=11 // pred_fallthru
          _
        // Predicated region
        $region33: #{tpu_custom_call.1} parent=11 // pred_check
          %p540 = pneg %p241
        $region34: #{tpu_custom_call.1} parent=11 // pred_check_branch
          %542 = sbr.rel (%p540) target = $region36
        $region35: #{tpu_custom_call.1} parent=11 // pred_region
          _
        $region36: #{tpu_custom_call.1} parent=11 // pred_fallthru
          _
        // Predicated region
        $region37: #{tpu_custom_call.1} parent=11 // pred_check
          %p543 = pneg %p262
        $region38: #{tpu_custom_call.1} parent=11 // pred_check_branch
          %545 = sbr.rel (%p543) target = $region40
        $region39: #{tpu_custom_call.1} parent=11 // pred_region
          %547 = vsyncadd [#allocation12], 0
          %s548 = sshll.u32 %s9, 4
          %s549 = int_to_ptr.hbm [resolvable:$true] %s548
          %s550 = sshll.u32 [#allocation13], 4
          %s551 = int_to_ptr.vmem [resolvable:$true] %s550
          %556 = dma.hbm_to_vmem [thread:$0]  %s549, 1024, %s551, [#allocation12], 64, 64, 4
        $region40: #{tpu_custom_call.1} parent=11 // pred_fallthru
          _
        // Predicated region
        $region41: #{tpu_custom_call.1} parent=11 // pred_check
          %p557 = pneg %p283
        $region42: #{tpu_custom_call.1} parent=11 // pred_check_branch
          %559 = sbr.rel (%p557) target = $region44
        $region43: #{tpu_custom_call.1} parent=11 // pred_region
          _
        $region44: #{tpu_custom_call.1} parent=11 // pred_fallthru
          _
        // Predicated region
        $region45: #{tpu_custom_call.1} parent=11 // pred_check
          %p560 = pneg %p304
        $region46: #{tpu_custom_call.1} parent=11 // pred_check_branch
          %562 = sbr.rel (%p560) target = $region48
        $region47: #{tpu_custom_call.1} parent=11 // pred_region
          _
        $region48: #{tpu_custom_call.1} parent=11 // pred_fallthru
          _
        // Predicated region
        $region49: #{tpu_custom_call.1} parent=11 // pred_check
          %p563 = pneg %p325
        $region50: #{tpu_custom_call.1} parent=11 // pred_check_branch
          %565 = sbr.rel (%p563) target = $region52
        $region51: #{tpu_custom_call.1} parent=11 // pred_region
          _
        $region52: #{tpu_custom_call.1} parent=11 // pred_fallthru
          _
        // Predicated region
        $region53: #{tpu_custom_call.1} parent=11 // pred_check
          %p566 = pneg %p346
        $region54: #{tpu_custom_call.1} parent=11 // pred_check_branch
          %568 = sbr.rel (%p566) target = $region56
        $region55: #{tpu_custom_call.1} parent=11 // pred_region
          %570 = vsyncadd [#allocation15], 0
          %s571 = sshll.u32 %s13, 4
          %s572 = int_to_ptr.hbm [resolvable:$true] %s571
          %s573 = sshll.u32 [#allocation14], 4
          %s574 = int_to_ptr.vmem [resolvable:$true] %s573
          %579 = dma.hbm_to_vmem [thread:$0]  %s572, 2048, %s574, [#allocation15], 128, 128, 8
        $region56: #{tpu_custom_call.1} parent=11 // pred_fallthru
          _
        // Predicated region
        $region57: #{tpu_custom_call.1} parent=11 // pred_check
          %p580 = pneg %p367
        $region58: #{tpu_custom_call.1} parent=11 // pred_check_branch
          %582 = sbr.rel (%p580) target = $region60
        $region59: #{tpu_custom_call.1} parent=11 // pred_region
          _
        $region60: #{tpu_custom_call.1} parent=11 // pred_fallthru
          _
        // Predicated region
        $region61: #{tpu_custom_call.1} parent=11 // pred_check
          %p583 = pneg %p388
        $region62: #{tpu_custom_call.1} parent=11 // pred_check_branch
          %585 = sbr.rel (%p583) target = $region64
        $region63: #{tpu_custom_call.1} parent=11 // pred_region
          %587 = vsyncadd [#allocation15], 0
          %s588 = sshll.u32 %s15, 4
          %s589 = int_to_ptr.hbm [resolvable:$true] %s588
          %s590 = sshll.u32 [#allocation16], 4
          %s591 = int_to_ptr.vmem [resolvable:$true] %s590
          %596 = dma.hbm_to_vmem [thread:$0]  %s589, 2048, %s591, [#allocation15], 64, 64, 4
        $region64: #{tpu_custom_call.1} parent=11 // pred_fallthru
          _
        // Predicated region
        $region65: #{tpu_custom_call.1} parent=11 // pred_check
          %p597 = pneg %p409
        $region66: #{tpu_custom_call.1} parent=11 // pred_check_branch
          %599 = sbr.rel (%p597) target = $region68
        $region67: #{tpu_custom_call.1} parent=11 // pred_region
          _
        $region68: #{tpu_custom_call.1} parent=11 // pred_fallthru
          _
        // Predicated region
        $region69: #{tpu_custom_call.1} parent=11 // pred_check
          %p600 = pneg %p430
        $region70: #{tpu_custom_call.1} parent=11 // pred_check_branch
          %602 = sbr.rel (%p600) target = $region72
        $region71: #{tpu_custom_call.1} parent=11 // pred_region
          _
        $region72: #{tpu_custom_call.1} parent=11 // pred_fallthru
          _
        // Predicated region
        $region73: #{tpu_custom_call.1} parent=11 // pred_check
          %p603 = pneg %p451
        $region74: #{tpu_custom_call.1} parent=11 // pred_check_branch
          %605 = sbr.rel (%p603) target = $region76
        $region75: #{tpu_custom_call.1} parent=11 // pred_region
          _
        $region76: #{tpu_custom_call.1} parent=11 // pred_fallthru
          _
      $region12: #{tpu_custom_call.1} parent=5 // pred_fallthru
        _
      %p606 = scmp.lt.s32.totalorder %s37, 2
      // Predicated region
      $region77: #{tpu_custom_call.1} parent=5 // pred_check
        %p607 = pneg %p606
      $region78: #{tpu_custom_call.1} parent=5 // pred_check_branch
        %609 = sbr.rel (%p607) target = $region80
      $region79: #{tpu_custom_call.1} parent=5 // pred_region
        // Predicated region
        $region81: #{tpu_custom_call.1} parent=79 // pred_check
          %p610 = pneg %p57
        $region82: #{tpu_custom_call.1} parent=79 // pred_check_branch
          %612 = sbr.rel (%p610) target = $region84
        $region83: #{tpu_custom_call.1} parent=79 // pred_region
          %s613 = sand.u32 %s47, 1
          %s614 = scalar_lea.sflag [#allocation3], %s613
          %s615 = sand.u32 %s47, 1
          %s616 = smul.addr %s615, 8
          %s617 = scalar_lea.vmem [#allocation2], %s616
          %619 = vsyncadd %s614, 0
          %s620 = smul.addr %s37, 8
          %s621 = scalar_lea.hbm %s0, %s620
          %s623 = sshll.u32 %s621, 4
          %s624 = int_to_ptr.hbm [resolvable:$true] %s623
          %s625 = sshll.u32 %s617, 4
          %s626 = int_to_ptr.vmem [resolvable:$true] %s625
          %628 = dma.hbm_to_vmem [thread:$0]  %s624, 128, %s626, %s614
        $region84: #{tpu_custom_call.1} parent=79 // pred_fallthru
          _
        // Predicated region
        $region85: #{tpu_custom_call.1} parent=79 // pred_check
          %p629 = pneg %p83
        $region86: #{tpu_custom_call.1} parent=79 // pred_check_branch
          %631 = sbr.rel (%p629) target = $region88
        $region87: #{tpu_custom_call.1} parent=79 // pred_region
          %s632 = sand.u32 %s37, 1
          %s633 = scalar_lea.sflag [#allocation6], %s632
          %s634 = sand.u32 %s73, 1
          %s635 = smul.addr %s634, 16
          %s636 = scalar_lea.vmem [#allocation5], %s635
          %s637 = smul.u32 2, %s37
          %639 = vsyncadd %s633, 0
          %s640 = smul.addr %s637, 8
          %s641 = scalar_lea.hbm %s1, %s640
          %s642 = sshll.u32 %s641, 4
          %s643 = int_to_ptr.hbm [resolvable:$true] %s642
          %s644 = sshll.u32 %s636, 4
          %s645 = int_to_ptr.vmem [resolvable:$true] %s644
          %650 = dma.hbm_to_vmem [thread:$0]  %s643, 256, %s645, %s633, 128, 128, 8
        $region88: #{tpu_custom_call.1} parent=79 // pred_fallthru
          _
        // Predicated region
        $region89: #{tpu_custom_call.1} parent=79 // pred_check
          %p651 = pneg %p109
        $region90: #{tpu_custom_call.1} parent=79 // pred_check_branch
          %653 = sbr.rel (%p651) target = $region92
        $region91: #{tpu_custom_call.1} parent=79 // pred_region
          %s654 = sand.u32 %s37, 1
          %s655 = scalar_lea.sflag [#allocation6], %s654
          %s656 = sand.u32 %s99, 1
          %s657 = scalar_lea.vmem [#allocation7], %s656
          %659 = vsyncadd %s655, 0
          %s660 = scalar_lea.hbm %s2, %s37
          %s662 = sshll.u32 %s660, 4
          %s663 = int_to_ptr.hbm [resolvable:$true] %s662
          %s664 = sshll.u32 %s657, 4
          %s665 = int_to_ptr.vmem [resolvable:$true] %s664
          %667 = dma.hbm_to_vmem [thread:$0]  %s663, 16, %s665, %s655
        $region92: #{tpu_custom_call.1} parent=79 // pred_fallthru
          _
      $region80: #{tpu_custom_call.1} parent=5 // pred_fallthru
        _
      %p668 = scmp.le.s32.totalorder 1, %s37
      %p669 = scmp.lt.s32.totalorder %s37, 3
      %p670 = pnand %p668, %p669
      %p671 = pneg %p670
      // Predicated region
      $region93: #{tpu_custom_call.1} parent=5 // pred_check
        _
      $region94: #{tpu_custom_call.1} parent=5 // pred_check_branch
        %673 = sbr.rel (%p670) target = $region96
      $region95: #{tpu_custom_call.1} parent=5 // pred_region
        %s674 = ssub.s32 %s37, 1
        %s675 = sand.u32 %s50, 1
        %s676 = scalar_lea.sflag [#allocation3], %s675
        %s677 = sand.u32 %s50, 1
        %s678 = smul.addr %s677, 8
        %s679 = scalar_lea.vmem [#allocation2], %s678
        // Predicated region
        $region97: #{tpu_custom_call.1} parent=95 // pred_check
          %p680 = pneg %p63
        $region98: #{tpu_custom_call.1} parent=95 // pred_check_branch
          %682 = sbr.rel (%p680) target = $region100
        $region99: #{tpu_custom_call.1} parent=95 // pred_region
          %684 = dma.done %s676, 128
        $region100: #{tpu_custom_call.1} parent=95 // pred_fallthru
          _
        %s685 = sand.u32 %s42, 1
        %s686 = scalar_lea.sflag [#allocation6], %s685
        %s687 = sand.u32 %s76, 1
        %s688 = smul.addr %s687, 16
        %s689 = scalar_lea.vmem [#allocation5], %s688
        // Predicated region
        $region101: #{tpu_custom_call.1} parent=95 // pred_check
          %p690 = pneg %p89
        $region102: #{tpu_custom_call.1} parent=95 // pred_check_branch
          %692 = sbr.rel (%p690) target = $region104
        $region103: #{tpu_custom_call.1} parent=95 // pred_region
          %694 = dma.done %s686, 256
        $region104: #{tpu_custom_call.1} parent=95 // pred_fallthru
          _
        %s695 = sand.u32 %s42, 1
        %s696 = scalar_lea.sflag [#allocation6], %s695
        %s697 = sand.u32 %s102, 1
        %s698 = scalar_lea.vmem [#allocation7], %s697
        // Predicated region
        $region105: #{tpu_custom_call.1} parent=95 // pred_check
          %p699 = pneg %p115
        $region106: #{tpu_custom_call.1} parent=95 // pred_check_branch
          %701 = sbr.rel (%p699) target = $region108
        $region107: #{tpu_custom_call.1} parent=95 // pred_region
          %703 = dma.done %s696, 16
        $region108: #{tpu_custom_call.1} parent=95 // pred_fallthru
          _
        // Predicated region
        $region109: #{tpu_custom_call.1} parent=95 // pred_check
          %p704 = pneg %p136
        $region110: #{tpu_custom_call.1} parent=95 // pred_check_branch
          %706 = sbr.rel (%p704) target = $region112
        $region111: #{tpu_custom_call.1} parent=95 // pred_region
          %708 = dma.done [#allocation9], 1024
        $region112: #{tpu_custom_call.1} parent=95 // pred_fallthru
          _
        // Predicated region
        $region113: #{tpu_custom_call.1} parent=95 // pred_check
          %p709 = pneg %p178
        $region114: #{tpu_custom_call.1} parent=95 // pred_check_branch
          %711 = sbr.rel (%p709) target = $region116
        $region115: #{tpu_custom_call.1} parent=95 // pred_region
          %713 = dma.done [#allocation9], 1024
        $region116: #{tpu_custom_call.1} parent=95 // pred_fallthru
          _
        // Predicated region
        $region117: #{tpu_custom_call.1} parent=95 // pred_check
          %p714 = pneg %p220
        $region118: #{tpu_custom_call.1} parent=95 // pred_check_branch
          %716 = sbr.rel (%p714) target = $region120
        $region119: #{tpu_custom_call.1} parent=95 // pred_region
          %718 = dma.done [#allocation12], 1024
        $region120: #{tpu_custom_call.1} parent=95 // pred_fallthru
          _
        // Predicated region
        $region121: #{tpu_custom_call.1} parent=95 // pred_check
          %p719 = pneg %p262
        $region122: #{tpu_custom_call.1} parent=95 // pred_check_branch
          %721 = sbr.rel (%p719) target = $region124
        $region123: #{tpu_custom_call.1} parent=95 // pred_region
          %723 = dma.done [#allocation12], 1024
        $region124: #{tpu_custom_call.1} parent=95 // pred_fallthru
          _
        // Predicated region
        $region125: #{tpu_custom_call.1} parent=95 // pred_check
          %p724 = pneg %p346
        $region126: #{tpu_custom_call.1} parent=95 // pred_check_branch
          %726 = sbr.rel (%p724) target = $region128
        $region127: #{tpu_custom_call.1} parent=95 // pred_region
          %728 = dma.done [#allocation15], 2048
        $region128: #{tpu_custom_call.1} parent=95 // pred_fallthru
          _
        // Predicated region
        $region129: #{tpu_custom_call.1} parent=95 // pred_check
          %p729 = pneg %p388
        $region130: #{tpu_custom_call.1} parent=95 // pred_check_branch
          %731 = sbr.rel (%p729) target = $region132
        $region131: #{tpu_custom_call.1} parent=95 // pred_region
          %733 = dma.done [#allocation15], 2048
        $region132: #{tpu_custom_call.1} parent=95 // pred_fallthru
          _
        %s734 = sand.u32 %s50, 1
        %s735 = scalar_lea.sflag [#allocation3], %s734
        %s736 = sand.u32 %s50, 1
        %s737 = smul.addr %s736, 8
        %s738 = scalar_lea.vmem [#allocation2], %s737
        %p739 = pneg %p63
        %p740 = pneg %p60
        %s741 = sand.u32 %s42, 1
        %s742 = scalar_lea.sflag [#allocation6], %s741
        %s743 = sand.u32 %s76, 1
        %s744 = smul.addr %s743, 16
        %s745 = scalar_lea.vmem [#allocation5], %s744
        %p746 = pneg %p89
        %p747 = pneg %p86
        %s748 = sand.u32 %s42, 1
        %s749 = scalar_lea.sflag [#allocation6], %s748
        %s750 = sand.u32 %s102, 1
        %s751 = scalar_lea.vmem [#allocation7], %s750
        %p752 = pneg %p115
        %p753 = pneg %p112
        %p754 = pneg %p136
        %p755 = pneg %p133
        %p756 = pneg %p157
        %p757 = pneg %p154
        %p758 = pneg %p178
        %p759 = pneg %p175
        %p760 = pneg %p199
        %p761 = pneg %p196
        %p762 = pneg %p220
        %p763 = pneg %p217
        %p764 = pneg %p241
        %p765 = pneg %p238
        %p766 = pneg %p262
        %p767 = pneg %p259
        %p768 = pneg %p283
        %p769 = pneg %p280
        %p770 = pneg %p304
        %p771 = pneg %p301
        %p772 = pneg %p325
        %p773 = pneg %p322
        %p774 = pneg %p346
        %p775 = pneg %p343
        %p776 = pneg %p367
        %p777 = pneg %p364
        %p778 = pneg %p388
        %p779 = pneg %p385
        %p780 = pneg %p409
        %p781 = pneg %p406
        %p782 = pneg %p430
        %p783 = pneg %p427
        %p784 = pneg %p451
        %p785 = pneg %p448
        %p786 = pneg %p477
        %p787 = pneg %p474
        %s788 = sand.u32 %s464, 1
        %s789 = scalar_lea.sflag [#allocation4], %s788
        %s790 = sand.u32 %s464, 1
        %s791 = smul.addr %s790, 8
        %s792 = scalar_lea.vmem [#allocation17], %s791
        %s793 = smul.u32 2, %s42
        %v794 = vld [vmem:[%s679] sm:$0xff]
        %v795 = vld [vmem:[%s689] sm:$0xff]
        %v796 = vld [vmem:[%s689 + $0x8] sm:$0xff]
        %v797 = vld [vmem:[%s698] sm:$0x1]
        %v798 = vpack.c.bf16 %v794, %v794
        %v799 = vpack.c.bf16 %v796, %v795
        %v800 = vld [vmem:[#allocation8] sm:$0xf]
        %v801 = vld [vmem:[#allocation8 + $0x4] sm:$0xf]
        %v802 = vld [vmem:[#allocation8 + $0x8] sm:$0xf]
        %v803 = vld [vmem:[#allocation8 + $0xc] sm:$0xf]
        %v804 = vld [vmem:[#allocation8 + $0x10] sm:$0xf]
        %v805 = vld [vmem:[#allocation8 + $0x14] sm:$0xf]
        %v806 = vld [vmem:[#allocation8 + $0x18] sm:$0xf]
        %v807 = vld [vmem:[#allocation8 + $0x1c] sm:$0xf]
        %v808 = vld [vmem:[#allocation8 + $0x20] sm:$0xf]
        %v809 = vld [vmem:[#allocation8 + $0x24] sm:$0xf]
        %v810 = vld [vmem:[#allocation8 + $0x28] sm:$0xf]
        %v811 = vld [vmem:[#allocation8 + $0x2c] sm:$0xf]
        %v812 = vld [vmem:[#allocation8 + $0x30] sm:$0xf]
        %v813 = vld [vmem:[#allocation8 + $0x34] sm:$0xf]
        %v814 = vld [vmem:[#allocation8 + $0x38] sm:$0xf]
        %v815 = vld [vmem:[#allocation8 + $0x3c] sm:$0xf]
        %v816 = vld [vmem:[%s4] sm:$0x1]
        %v818 = vperm.slane %v816, 0
        %v836 = vunpack.c.l.b16 %v800
        %v837 = vunpack.c.l.b16 %v801
        %v838 = vunpack.c.l.b16 %v802
        %v839 = vunpack.c.l.b16 %v803
        %v840 = vunpack.c.l.b16 %v804
        %v841 = vunpack.c.l.b16 %v805
        %v842 = vunpack.c.l.b16 %v806
        %v843 = vunpack.c.l.b16 %v807
        %v844 = vunpack.c.l.b16 %v808
        %v845 = vunpack.c.l.b16 %v809
        %v846 = vunpack.c.l.b16 %v810
        %v847 = vunpack.c.l.b16 %v811
        %v848 = vunpack.c.l.b16 %v812
        %v849 = vunpack.c.l.b16 %v813
        %v850 = vunpack.c.l.b16 %v814
        %v851 = vunpack.c.l.b16 %v815
        %v852 = vpack.c.b16 %v837, %v836
        %v853 = vpack.c.b16 %v839, %v838
        %v854 = vpack.c.b16 %v841, %v840
        %v855 = vpack.c.b16 %v843, %v842
        %v856 = vpack.c.b16 %v845, %v844
        %v857 = vpack.c.b16 %v847, %v846
        %v858 = vpack.c.b16 %v849, %v848
        %v859 = vpack.c.b16 %v851, %v850
        %868 = vmatpush.bf16.msra.mxu0 %v859
        %869 = vmatpush.bf16.msra.mxu0 %v858
        %870 = vmatpush.bf16.msra.mxu0 %v857
        %871 = vmatpush.bf16.msra.mxu0 %v856
        %872 = vmatpush.bf16.msra.mxu0 %v855
        %873 = vmatpush.bf16.msra.mxu0 %v854
        %874 = vmatpush.bf16.msra.mxu0 %v853
        %875 = vmatpush.bf16.msra.mxu0 %v852
        %876 = vmatmul.bf16.gmra.mxu0 %v798
        %v877 = vpop.f32.mrf.mxu0
        %v878 = vadd.f32 %v818, %v877
        %v879 = vpop.f32.mrf.mxu0
        %880 = vdwg.mxu0
        %v881 = vld [vmem:[#allocation10] sm:$0xf]
        %v882 = vld [vmem:[#allocation10 + $0x4] sm:$0xf]
        %v883 = vld [vmem:[#allocation10 + $0x8] sm:$0xf]
        %v884 = vld [vmem:[#allocation10 + $0xc] sm:$0xf]
        %v885 = vld [vmem:[#allocation10 + $0x10] sm:$0xf]
        %v886 = vld [vmem:[#allocation10 + $0x14] sm:$0xf]
        %v887 = vld [vmem:[#allocation10 + $0x18] sm:$0xf]
        %v888 = vld [vmem:[#allocation10 + $0x1c] sm:$0xf]
        %v889 = vld [vmem:[#allocation10 + $0x20] sm:$0xf]
        %v890 = vld [vmem:[#allocation10 + $0x24] sm:$0xf]
        %v891 = vld [vmem:[#allocation10 + $0x28] sm:$0xf]
        %v892 = vld [vmem:[#allocation10 + $0x2c] sm:$0xf]
        %v893 = vld [vmem:[#allocation10 + $0x30] sm:$0xf]
        %v894 = vld [vmem:[#allocation10 + $0x34] sm:$0xf]
        %v895 = vld [vmem:[#allocation10 + $0x38] sm:$0xf]
        %v896 = vld [vmem:[#allocation10 + $0x3c] sm:$0xf]
        %v897 = vld [vmem:[%s6] sm:$0x1]
        %v899 = vperm.slane %v897, 0
        %v917 = vunpack.c.l.b16 %v881
        %v918 = vunpack.c.l.b16 %v882
        %v919 = vunpack.c.l.b16 %v883
        %v920 = vunpack.c.l.b16 %v884
        %v921 = vunpack.c.l.b16 %v885
        %v922 = vunpack.c.l.b16 %v886
        %v923 = vunpack.c.l.b16 %v887
        %v924 = vunpack.c.l.b16 %v888
        %v925 = vunpack.c.l.b16 %v889
        %v926 = vunpack.c.l.b16 %v890
        %v927 = vunpack.c.l.b16 %v891
        %v928 = vunpack.c.l.b16 %v892
        %v929 = vunpack.c.l.b16 %v893
        %v930 = vunpack.c.l.b16 %v894
        %v931 = vunpack.c.l.b16 %v895
        %v932 = vunpack.c.l.b16 %v896
        %v933 = vpack.c.b16 %v918, %v917
        %v934 = vpack.c.b16 %v920, %v919
        %v935 = vpack.c.b16 %v922, %v921
        %v936 = vpack.c.b16 %v924, %v923
        %v937 = vpack.c.b16 %v926, %v925
        %v938 = vpack.c.b16 %v928, %v927
        %v939 = vpack.c.b16 %v930, %v929
        %v940 = vpack.c.b16 %v932, %v931
        %949 = vmatpush.bf16.msra.mxu0 %v940
        %950 = vmatpush.bf16.msra.mxu0 %v939
        %951 = vmatpush.bf16.msra.mxu0 %v938
        %952 = vmatpush.bf16.msra.mxu0 %v937
        %953 = vmatpush.bf16.msra.mxu0 %v936
        %954 = vmatpush.bf16.msra.mxu0 %v935
        %955 = vmatpush.bf16.msra.mxu0 %v934
        %956 = vmatpush.bf16.msra.mxu0 %v933
        %957 = vmatmul.bf16.gmra.mxu0 %v799
        %v958 = vpop.f32.mrf.mxu0
        %v959 = vadd.f32 %v899, %v958
        %v960 = vpop.f32.mrf.mxu0
        %v961 = vadd.f32 %v899, %v960
        %962 = vdwg.mxu0
        %v963 = vld [vmem:[#allocation11] sm:$0xf]
        %v964 = vld [vmem:[#allocation11 + $0x4] sm:$0xf]
        %v965 = vld [vmem:[#allocation11 + $0x8] sm:$0xf]
        %v966 = vld [vmem:[#allocation11 + $0xc] sm:$0xf]
        %v967 = vld [vmem:[#allocation11 + $0x10] sm:$0xf]
        %v968 = vld [vmem:[#allocation11 + $0x14] sm:$0xf]
        %v969 = vld [vmem:[#allocation11 + $0x18] sm:$0xf]
        %v970 = vld [vmem:[#allocation11 + $0x1c] sm:$0xf]
        %v971 = vld [vmem:[#allocation11 + $0x20] sm:$0xf]
        %v972 = vld [vmem:[#allocation11 + $0x24] sm:$0xf]
        %v973 = vld [vmem:[#allocation11 + $0x28] sm:$0xf]
        %v974 = vld [vmem:[#allocation11 + $0x2c] sm:$0xf]
        %v975 = vld [vmem:[#allocation11 + $0x30] sm:$0xf]
        %v976 = vld [vmem:[#allocation11 + $0x34] sm:$0xf]
        %v977 = vld [vmem:[#allocation11 + $0x38] sm:$0xf]
        %v978 = vld [vmem:[#allocation11 + $0x3c] sm:$0xf]
        %v979 = vld [vmem:[%s8] sm:$0x1]
        %v981 = vperm.slane %v979, 0
        %v999 = vunpack.c.l.b16 %v963
        %v1000 = vunpack.c.l.b16 %v964
        %v1001 = vunpack.c.l.b16 %v965
        %v1002 = vunpack.c.l.b16 %v966
        %v1003 = vunpack.c.l.b16 %v967
        %v1004 = vunpack.c.l.b16 %v968
        %v1005 = vunpack.c.l.b16 %v969
        %v1006 = vunpack.c.l.b16 %v970
        %v1007 = vunpack.c.l.b16 %v971
        %v1008 = vunpack.c.l.b16 %v972
        %v1009 = vunpack.c.l.b16 %v973
        %v1010 = vunpack.c.l.b16 %v974
        %v1011 = vunpack.c.l.b16 %v975
        %v1012 = vunpack.c.l.b16 %v976
        %v1013 = vunpack.c.l.b16 %v977
        %v1014 = vunpack.c.l.b16 %v978
        %v1015 = vpack.c.b16 %v1000, %v999
        %v1016 = vpack.c.b16 %v1002, %v1001
        %v1017 = vpack.c.b16 %v1004, %v1003
        %v1018 = vpack.c.b16 %v1006, %v1005
        %v1019 = vpack.c.b16 %v1008, %v1007
        %v1020 = vpack.c.b16 %v1010, %v1009
        %v1021 = vpack.c.b16 %v1012, %v1011
        %v1022 = vpack.c.b16 %v1014, %v1013
        %1031 = vmatpush.bf16.msra.mxu0 %v1022
        %1032 = vmatpush.bf16.msra.mxu0 %v1021
        %1033 = vmatpush.bf16.msra.mxu0 %v1020
        %1034 = vmatpush.bf16.msra.mxu0 %v1019
        %1035 = vmatpush.bf16.msra.mxu0 %v1018
        %1036 = vmatpush.bf16.msra.mxu0 %v1017
        %1037 = vmatpush.bf16.msra.mxu0 %v1016
        %1038 = vmatpush.bf16.msra.mxu0 %v1015
        %1039 = vmatmul.bf16.gmra.mxu0 %v799
        %v1040 = vpop.f32.mrf.mxu0
        %v1041 = vadd.f32 %v981, %v1040
        %v1042 = vpop.f32.mrf.mxu0
        %v1043 = vadd.f32 %v981, %v1042
        %1044 = vdwg.mxu0
        %vm1045 = vcmp.ne.s32.totalorder %v797, 0
        %v1046 = vsel %vm1045, 1, 0
        %v1047 = vperm.slane %v1046, 0
        %vm1048 = vcmp.eq.s32.totalorder %v1047, 1
        %vm1049 = vcmask 261120
        %v1051 = vsel %vm1049, %v878, 0
        %v1054 = vsel %vm1049, %v959, 0
        %v1057 = vsel %vm1049, %v961, 0
        %1059 = vmatpush.xpose.msra.mxu0 0.0
        %1060 = vmatpush.xpose.msra.mxu0 0.0
        %1061 = vmatpush.xpose.msra.mxu0 0.0
        %1062 = vmatpush.xpose.msra.mxu0 0.0
        %1063 = vmatpush.xpose.msra.mxu0 0.0
        %1064 = vmatpush.xpose.msra.mxu0 0.0
        %1065 = vmatpush.xpose.msra.mxu0 0.0
        %1066 = vmatpush.xpose.msra.mxu0 0.0
        %1067 = vmatpush.xpose.msra.mxu0 0.0
        %1068 = vmatpush.xpose.msra.mxu0 0.0
        %1069 = vmatpush.xpose.msra.mxu0 0.0
        %1070 = vmatpush.xpose.msra.mxu0 0.0
        %1071 = vmatpush.xpose.msra.mxu0 0.0
        %1072 = vmatpush.xpose.msra.mxu0 0.0
        %1073 = vmatpush.xpose.msra.mxu0 %v1057
        %1074 = vmatpush.xpose.msra.mxu0 %v1054
        %1075 = vmatmul.f32.gmra.mxu0 %v1051
        %v1076 = vpop.f32.mrf.mxu0
        %v1077 = vadd.f32 0.0, %v1076
        %1078 = vdwg.mxu0
        %v1079 = vsel %vm1048, %v1077, -1e+10
        %vm1080 = vcmask 130048
        %v1081 = vsel %vm1080, %v1079, -inf
        %1082 = vmax.xlane.f32.xlu0 %v1081
        %v1083 = vpop.xlane.xlu0 %1082
        %v1084 = vsub.f32 %v1079, %v1083
        %v1085 = vmul.f32 %v1084, 1.442695
        %v1086 = vpow.pop %v1085
        %v1087 = vsel %vm1080, %v1086, 0.0
        %1088 = vadd.xlane.f32.xlu0 %v1087
        %v1089 = vpop.xlane.xlu0 %1088
        %v1090 = vrcp.pop %v1089
        %v1091 = vmul.f32 %v1086, %v1090
        %v1093 = vsel %vm1080, %v1091, 0
        %1095 = vmatpush.msra.mxu0 0.0
        %1096 = vmatpush.msra.mxu0 0.0
        %1097 = vmatpush.msra.mxu0 0.0
        %1098 = vmatpush.msra.mxu0 0.0
        %1099 = vmatpush.msra.mxu0 0.0
        %1100 = vmatpush.msra.mxu0 0.0
        %1101 = vmatpush.msra.mxu0 0.0
        %1102 = vmatpush.msra.mxu0 0.0
        %1103 = vmatpush.msra.mxu0 0.0
        %1104 = vmatpush.msra.mxu0 0.0
        %1105 = vmatpush.msra.mxu0 0.0
        %1106 = vmatpush.msra.mxu0 0.0
        %1107 = vmatpush.msra.mxu0 0.0
        %1108 = vmatpush.msra.mxu0 0.0
        %1109 = vmatpush.msra.mxu0 %v1043
        %1110 = vmatpush.msra.mxu0 %v1041
        %1111 = vmatmul.f32.gmra.mxu0 %v1093
        %v1112 = vpop.f32.mrf.mxu0
        %v1113 = vadd.f32 0.0, %v1112
        %1114 = vdwg.mxu0
        %1115 = vrot.lane.b32.xlu0 %v878, 96
        %v1116 = vpop.permute.xlu0 %1115
        %1117 = vrot.lane.b32.xlu0 %v959, 96
        %v1118 = vpop.permute.xlu0 %1117
        %1119 = vrot.lane.b32.xlu0 %v961, 96
        %v1120 = vpop.permute.xlu0 %1119
        %v1121 = vsel %vm1049, %v1116, 0
        %v1123 = vsel %vm1049, %v1118, 0
        %v1125 = vsel %vm1049, %v1120, 0
        %1127 = vmatpush.xpose.msra.mxu0 0.0
        %1128 = vmatpush.xpose.msra.mxu0 0.0
        %1129 = vmatpush.xpose.msra.mxu0 0.0
        %1130 = vmatpush.xpose.msra.mxu0 0.0
        %1131 = vmatpush.xpose.msra.mxu0 0.0
        %1132 = vmatpush.xpose.msra.mxu0 0.0
        %1133 = vmatpush.xpose.msra.mxu0 0.0
        %1134 = vmatpush.xpose.msra.mxu0 0.0
        %1135 = vmatpush.xpose.msra.mxu0 0.0
        %1136 = vmatpush.xpose.msra.mxu0 0.0
        %1137 = vmatpush.xpose.msra.mxu0 0.0
        %1138 = vmatpush.xpose.msra.mxu0 0.0
        %1139 = vmatpush.xpose.msra.mxu0 0.0
        %1140 = vmatpush.xpose.msra.mxu0 0.0
        %1141 = vmatpush.xpose.msra.mxu0 %v1125
        %1142 = vmatpush.xpose.msra.mxu0 %v1123
        %1143 = vmatmul.f32.gmra.mxu0 %v1121
        %v1144 = vpop.f32.mrf.mxu0
        %v1145 = vadd.f32 0.0, %v1144
        %1146 = vdwg.mxu0
        %v1147 = vsel %vm1048, %v1145, -1e+10
        %v1148 = vsel %vm1080, %v1147, -inf
        %1149 = vmax.xlane.f32.xlu0 %v1148
        %v1150 = vpop.xlane.xlu0 %1149
        %v1151 = vsub.f32 %v1147, %v1150
        %v1152 = vmul.f32 %v1151, 1.442695
        %v1153 = vpow.pop %v1152
        %v1154 = vsel %vm1080, %v1153, 0.0
        %1155 = vadd.xlane.f32.xlu0 %v1154
        %v1156 = vpop.xlane.xlu0 %1155
        %v1157 = vrcp.pop %v1156
        %v1158 = vmul.f32 %v1153, %v1157
        %1161 = vrot.lane.b32.xlu0 %v1041, 96
        %v1162 = vpop.permute.xlu0 %1161
        %1163 = vrot.lane.b32.xlu0 %v1043, 96
        %v1164 = vpop.permute.xlu0 %1163
        %v1168 = vsel %vm1080, %v1158, 0
        %1170 = vmatpush.msra.mxu0 0.0
        %1171 = vmatpush.msra.mxu0 0.0
        %1172 = vmatpush.msra.mxu0 0.0
        %1173 = vmatpush.msra.mxu0 0.0
        %1174 = vmatpush.msra.mxu0 0.0
        %1175 = vmatpush.msra.mxu0 0.0
        %1176 = vmatpush.msra.mxu0 0.0
        %1177 = vmatpush.msra.mxu0 0.0
        %1178 = vmatpush.msra.mxu0 0.0
        %1179 = vmatpush.msra.mxu0 0.0
        %1180 = vmatpush.msra.mxu0 0.0
        %1181 = vmatpush.msra.mxu0 0.0
        %1182 = vmatpush.msra.mxu0 0.0
        %1183 = vmatpush.msra.mxu0 0.0
        %1184 = vmatpush.msra.mxu0 %v1164
        %1185 = vmatpush.msra.mxu0 %v1162
        %1186 = vmatmul.f32.gmra.mxu0 %v1168
        %v1187 = vpop.f32.mrf.mxu0
        %v1188 = vadd.f32 0.0, %v1187
        %1189 = vdwg.mxu0
        %1190 = vrot.lane.b32.xlu0 %v878, 64
        %v1191 = vpop.permute.xlu0 %1190
        %1192 = vrot.lane.b32.xlu0 %v959, 64
        %v1193 = vpop.permute.xlu0 %1192
        %1194 = vrot.lane.b32.xlu0 %v961, 64
        %v1195 = vpop.permute.xlu0 %1194
        %v1196 = vsel %vm1049, %v1191, 0
        %v1198 = vsel %vm1049, %v1193, 0
        %v1200 = vsel %vm1049, %v1195, 0
        %1202 = vmatpush.xpose.msra.mxu0 0.0
        %1203 = vmatpush.xpose.msra.mxu0 0.0
        %1204 = vmatpush.xpose.msra.mxu0 0.0
        %1205 = vmatpush.xpose.msra.mxu0 0.0
        %1206 = vmatpush.xpose.msra.mxu0 0.0
        %1207 = vmatpush.xpose.msra.mxu0 0.0
        %1208 = vmatpush.xpose.msra.mxu0 0.0
        %1209 = vmatpush.xpose.msra.mxu0 0.0
        %1210 = vmatpush.xpose.msra.mxu0 0.0
        %1211 = vmatpush.xpose.msra.mxu0 0.0
        %1212 = vmatpush.xpose.msra.mxu0 0.0
        %1213 = vmatpush.xpose.msra.mxu0 0.0
        %1214 = vmatpush.xpose.msra.mxu0 0.0
        %1215 = vmatpush.xpose.msra.mxu0 0.0
        %1216 = vmatpush.xpose.msra.mxu0 %v1200
        %1217 = vmatpush.xpose.msra.mxu0 %v1198
        %1218 = vmatmul.f32.gmra.mxu0 %v1196
        %v1219 = vpop.f32.mrf.mxu0
        %v1220 = vadd.f32 0.0, %v1219
        %1221 = vdwg.mxu0
        %v1222 = vsel %vm1048, %v1220, -1e+10
        %v1223 = vsel %vm1080, %v1222, -inf
        %1224 = vmax.xlane.f32.xlu0 %v1223
        %v1225 = vpop.xlane.xlu0 %1224
        %v1226 = vsub.f32 %v1222, %v1225
        %v1227 = vmul.f32 %v1226, 1.442695
        %v1228 = vpow.pop %v1227
        %v1229 = vsel %vm1080, %v1228, 0.0
        %1230 = vadd.xlane.f32.xlu0 %v1229
        %v1231 = vpop.xlane.xlu0 %1230
        %v1232 = vrcp.pop %v1231
        %v1233 = vmul.f32 %v1228, %v1232
        %1234 = vrot.lane.b32.xlu0 %v1041, 64
        %v1235 = vpop.permute.xlu0 %1234
        %1236 = vrot.lane.b32.xlu0 %v1043, 64
        %v1237 = vpop.permute.xlu0 %1236
        %v1241 = vsel %vm1080, %v1233, 0
        %1243 = vmatpush.msra.mxu0 0.0
        %1244 = vmatpush.msra.mxu0 0.0
        %1245 = vmatpush.msra.mxu0 0.0
        %1246 = vmatpush.msra.mxu0 0.0
        %1247 = vmatpush.msra.mxu0 0.0
        %1248 = vmatpush.msra.mxu0 0.0
        %1249 = vmatpush.msra.mxu0 0.0
        %1250 = vmatpush.msra.mxu0 0.0
        %1251 = vmatpush.msra.mxu0 0.0
        %1252 = vmatpush.msra.mxu0 0.0
        %1253 = vmatpush.msra.mxu0 0.0
        %1254 = vmatpush.msra.mxu0 0.0
        %1255 = vmatpush.msra.mxu0 0.0
        %1256 = vmatpush.msra.mxu0 0.0
        %1257 = vmatpush.msra.mxu0 %v1237
        %1258 = vmatpush.msra.mxu0 %v1235
        %1259 = vmatmul.f32.gmra.mxu0 %v1241
        %v1260 = vpop.f32.mrf.mxu0
        %v1261 = vadd.f32 0.0, %v1260
        %1262 = vdwg.mxu0
        %1263 = vrot.lane.b32.xlu0 %v878, 32
        %v1264 = vpop.permute.xlu0 %1263
        %1265 = vrot.lane.b32.xlu0 %v959, 32
        %v1266 = vpop.permute.xlu0 %1265
        %1267 = vrot.lane.b32.xlu0 %v961, 32
        %v1268 = vpop.permute.xlu0 %1267
        %v1269 = vsel %vm1049, %v1264, 0
        %v1271 = vsel %vm1049, %v1266, 0
        %v1273 = vsel %vm1049, %v1268, 0
        %1275 = vmatpush.xpose.msra.mxu0 0.0
        %1276 = vmatpush.xpose.msra.mxu0 0.0
        %1277 = vmatpush.xpose.msra.mxu0 0.0
        %1278 = vmatpush.xpose.msra.mxu0 0.0
        %1279 = vmatpush.xpose.msra.mxu0 0.0
        %1280 = vmatpush.xpose.msra.mxu0 0.0
        %1281 = vmatpush.xpose.msra.mxu0 0.0
        %1282 = vmatpush.xpose.msra.mxu0 0.0
        %1283 = vmatpush.xpose.msra.mxu0 0.0
        %1284 = vmatpush.xpose.msra.mxu0 0.0
        %1285 = vmatpush.xpose.msra.mxu0 0.0
        %1286 = vmatpush.xpose.msra.mxu0 0.0
        %1287 = vmatpush.xpose.msra.mxu0 0.0
        %1288 = vmatpush.xpose.msra.mxu0 0.0
        %1289 = vmatpush.xpose.msra.mxu0 %v1273
        %1290 = vmatpush.xpose.msra.mxu0 %v1271
        %1291 = vmatmul.f32.gmra.mxu0 %v1269
        %v1292 = vpop.f32.mrf.mxu0
        %v1293 = vadd.f32 0.0, %v1292
        %1294 = vdwg.mxu0
        %v1295 = vsel %vm1048, %v1293, -1e+10
        %v1296 = vsel %vm1080, %v1295, -inf
        %1297 = vmax.xlane.f32.xlu0 %v1296
        %v1298 = vpop.xlane.xlu0 %1297
        %v1299 = vsub.f32 %v1295, %v1298
        %v1300 = vmul.f32 %v1299, 1.442695
        %v1301 = vpow.pop %v1300
        %v1302 = vsel %vm1080, %v1301, 0.0
        %1303 = vadd.xlane.f32.xlu0 %v1302
        %v1304 = vpop.xlane.xlu0 %1303
        %v1305 = vrcp.pop %v1304
        %v1306 = vmul.f32 %v1301, %v1305
        %1307 = vrot.lane.b32.xlu0 %v1041, 32
        %v1308 = vpop.permute.xlu0 %1307
        %1309 = vrot.lane.b32.xlu0 %v1043, 32
        %v1310 = vpop.permute.xlu0 %1309
        %v1314 = vsel %vm1080, %v1306, 0
        %1316 = vmatpush.msra.mxu0 0.0
        %1317 = vmatpush.msra.mxu0 0.0
        %1318 = vmatpush.msra.mxu0 0.0
        %1319 = vmatpush.msra.mxu0 0.0
        %1320 = vmatpush.msra.mxu0 0.0
        %1321 = vmatpush.msra.mxu0 0.0
        %1322 = vmatpush.msra.mxu0 0.0
        %1323 = vmatpush.msra.mxu0 0.0
        %1324 = vmatpush.msra.mxu0 0.0
        %1325 = vmatpush.msra.mxu0 0.0
        %1326 = vmatpush.msra.mxu0 0.0
        %1327 = vmatpush.msra.mxu0 0.0
        %1328 = vmatpush.msra.mxu0 0.0
        %1329 = vmatpush.msra.mxu0 0.0
        %1330 = vmatpush.msra.mxu0 %v1310
        %1331 = vmatpush.msra.mxu0 %v1308
        %1332 = vmatmul.f32.gmra.mxu0 %v1314
        %v1333 = vpop.f32.mrf.mxu0
        %v1334 = vadd.f32 0.0, %v1333
        %1335 = vdwg.mxu0
        %1337 = vrot.lane.b32.xlu0 %v1188, 32
        %v1338 = vpop.permute.xlu0 %1337
        %1341 = vrot.lane.b32.xlu0 %v1261, 64
        %v1342 = vpop.permute.xlu0 %1341
        %1345 = vrot.lane.b32.xlu0 %v1334, 96
        %v1346 = vpop.permute.xlu0 %1345
        %v1348 = vsel %vm1049, %v1113, %v1338
        %vm1349 = vcmask 523264
        %v1350 = vsel %vm1349, %v1348, %v1342
        %vm1351 = vcmask 785408
        %v1352 = vsel %vm1351, %v1350, %v1346
        %v1353 = vpack.c.bf16 %v1352, %v1352
        %v1354 = vld [vmem:[#allocation13] sm:$0xf]
        %v1355 = vld [vmem:[#allocation13 + $0x4] sm:$0xf]
        %v1356 = vld [vmem:[#allocation13 + $0x8] sm:$0xf]
        %v1357 = vld [vmem:[#allocation13 + $0xc] sm:$0xf]
        %v1358 = vld [vmem:[#allocation13 + $0x10] sm:$0xf]
        %v1359 = vld [vmem:[#allocation13 + $0x14] sm:$0xf]
        %v1360 = vld [vmem:[#allocation13 + $0x18] sm:$0xf]
        %v1361 = vld [vmem:[#allocation13 + $0x1c] sm:$0xf]
        %v1362 = vld [vmem:[#allocation13 + $0x20] sm:$0xf]
        %v1363 = vld [vmem:[#allocation13 + $0x24] sm:$0xf]
        %v1364 = vld [vmem:[#allocation13 + $0x28] sm:$0xf]
        %v1365 = vld [vmem:[#allocation13 + $0x2c] sm:$0xf]
        %v1366 = vld [vmem:[#allocation13 + $0x30] sm:$0xf]
        %v1367 = vld [vmem:[#allocation13 + $0x34] sm:$0xf]
        %v1368 = vld [vmem:[#allocation13 + $0x38] sm:$0xf]
        %v1369 = vld [vmem:[#allocation13 + $0x3c] sm:$0xf]
        %v1370 = vld [vmem:[%s10] sm:$0x1]
        %v1372 = vperm.slane %v1370, 0
        %v1390 = vunpack.c.l.b16 %v1354
        %v1391 = vunpack.c.l.b16 %v1355
        %v1392 = vunpack.c.l.b16 %v1356
        %v1393 = vunpack.c.l.b16 %v1357
        %v1394 = vunpack.c.l.b16 %v1358
        %v1395 = vunpack.c.l.b16 %v1359
        %v1396 = vunpack.c.l.b16 %v1360
        %v1397 = vunpack.c.l.b16 %v1361
        %v1398 = vunpack.c.l.b16 %v1362
        %v1399 = vunpack.c.l.b16 %v1363
        %v1400 = vunpack.c.l.b16 %v1364
        %v1401 = vunpack.c.l.b16 %v1365
        %v1402 = vunpack.c.l.b16 %v1366
        %v1403 = vunpack.c.l.b16 %v1367
        %v1404 = vunpack.c.l.b16 %v1368
        %v1405 = vunpack.c.l.b16 %v1369
        %v1406 = vpack.c.b16 %v1391, %v1390
        %v1407 = vpack.c.b16 %v1393, %v1392
        %v1408 = vpack.c.b16 %v1395, %v1394
        %v1409 = vpack.c.b16 %v1397, %v1396
        %v1410 = vpack.c.b16 %v1399, %v1398
        %v1411 = vpack.c.b16 %v1401, %v1400
        %v1412 = vpack.c.b16 %v1403, %v1402
        %v1413 = vpack.c.b16 %v1405, %v1404
        %1422 = vmatpush.bf16.msra.mxu0 %v1413
        %1423 = vmatpush.bf16.msra.mxu0 %v1412
        %1424 = vmatpush.bf16.msra.mxu0 %v1411
        %1425 = vmatpush.bf16.msra.mxu0 %v1410
        %1426 = vmatpush.bf16.msra.mxu0 %v1409
        %1427 = vmatpush.bf16.msra.mxu0 %v1408
        %1428 = vmatpush.bf16.msra.mxu0 %v1407
        %1429 = vmatpush.bf16.msra.mxu0 %v1406
        %1430 = vmatmul.bf16.gmra.mxu0 %v1353
        %v1431 = vpop.f32.mrf.mxu0
        %v1432 = vadd.f32 %v1372, %v1431
        %v1433 = vpop.f32.mrf.mxu0
        %1434 = vdwg.mxu0
        %v1435 = vadd.f32 %v1432, %v794
        %v1436 = vld [vmem:[%s11] sm:$0x1]
        %v1437 = vld [vmem:[%s12] sm:$0x1]
        %1438 = vadd.xlane.f32.xlu0 %v1435
        %v1439 = vpop.xlane.xlu0 %1438
        %v1440 = vrcp.pop 128.0
        %v1441 = vmul.f32 128.0, %v1440
        %v1442 = vsub.f32 1.0, %v1441
        %v1443 = vmul.f32 %v1440, %v1442
        %v1444 = vadd.f32 %v1440, %v1443
        %vm1445 = vweird.f32 %v1440
        %v1446 = vsel %vm1445, %v1440, %v1444
        %v1447 = vmul.f32 %v1439, %v1446
        %v1448 = vsub.f32 %v1435, %v1447
        %v1449 = vmul.f32 %v1448, %v1448
        %1450 = vadd.xlane.f32.xlu0 %v1449
        %v1451 = vpop.xlane.xlu0 %1450
        %v1452 = vmul.f32 %v1451, %v1446
        %v1453 = vadd.f32 %v1452, 1e-05
        %v1454 = vrsqrt.pop %v1453
        %v1455 = vmul.f32 %v1454, %v1453
        %v1456 = vmul.f32 %v1455, %v1454
        %v1457 = vmul.f32 0.5, %v1456
        %v1458 = vsub.f32 1.5, %v1457
        %v1459 = vmul.f32 %v1454, %v1458
        %vm1460 = vweird.f32 %v1453
        %vm1461 = vweird.f32 %v1454
        %vm1462 = vmor %vm1460, %vm1461
        %v1463 = vsel %vm1462, %v1454, %v1459
        %v1464 = vmul.f32 %v1448, %v1463
        %v1466 = vperm.slane %v1436, 0
        %v1468 = vmul.f32 %v1464, %v1466
        %v1470 = vperm.slane %v1437, 0
        %v1472 = vadd.f32 %v1468, %v1470
        %v1473 = vpack.c.bf16 %v1472, %v1472
        %v1474 = vld [vmem:[#allocation14] sm:$0xff]
        %v1475 = vld [vmem:[#allocation14 + $0x8] sm:$0xff]
        %v1476 = vld [vmem:[#allocation14 + $0x10] sm:$0xff]
        %v1477 = vld [vmem:[#allocation14 + $0x18] sm:$0xff]
        %v1478 = vld [vmem:[#allocation14 + $0x20] sm:$0xff]
        %v1479 = vld [vmem:[#allocation14 + $0x28] sm:$0xff]
        %v1480 = vld [vmem:[#allocation14 + $0x30] sm:$0xff]
        %v1481 = vld [vmem:[#allocation14 + $0x38] sm:$0xff]
        %v1482 = vld [vmem:[#allocation14 + $0x40] sm:$0xff]
        %v1483 = vld [vmem:[#allocation14 + $0x48] sm:$0xff]
        %v1484 = vld [vmem:[#allocation14 + $0x50] sm:$0xff]
        %v1485 = vld [vmem:[#allocation14 + $0x58] sm:$0xff]
        %v1486 = vld [vmem:[#allocation14 + $0x60] sm:$0xff]
        %v1487 = vld [vmem:[#allocation14 + $0x68] sm:$0xff]
        %v1488 = vld [vmem:[#allocation14 + $0x70] sm:$0xff]
        %v1489 = vld [vmem:[#allocation14 + $0x78] sm:$0xff]
        %v1490 = vld [vmem:[%s14] sm:$0x3]
        %v1492 = vperm.slane %v1490, 0
        %v1493 = vperm.slane %v1490, 1
        %v1512 = vunpack.c.l.b16 %v1474
        %v1513 = vunpack.c.h.b16 %v1474
        %v1514 = vunpack.c.l.b16 %v1475
        %v1515 = vunpack.c.h.b16 %v1475
        %v1516 = vunpack.c.l.b16 %v1476
        %v1517 = vunpack.c.h.b16 %v1476
        %v1518 = vunpack.c.l.b16 %v1477
        %v1519 = vunpack.c.h.b16 %v1477
        %v1520 = vunpack.c.l.b16 %v1478
        %v1521 = vunpack.c.h.b16 %v1478
        %v1522 = vunpack.c.l.b16 %v1479
        %v1523 = vunpack.c.h.b16 %v1479
        %v1524 = vunpack.c.l.b16 %v1480
        %v1525 = vunpack.c.h.b16 %v1480
        %v1526 = vunpack.c.l.b16 %v1481
        %v1527 = vunpack.c.h.b16 %v1481
        %v1528 = vunpack.c.l.b16 %v1482
        %v1529 = vunpack.c.h.b16 %v1482
        %v1530 = vunpack.c.l.b16 %v1483
        %v1531 = vunpack.c.h.b16 %v1483
        %v1532 = vunpack.c.l.b16 %v1484
        %v1533 = vunpack.c.h.b16 %v1484
        %v1534 = vunpack.c.l.b16 %v1485
        %v1535 = vunpack.c.h.b16 %v1485
        %v1536 = vunpack.c.l.b16 %v1486
        %v1537 = vunpack.c.h.b16 %v1486
        %v1538 = vunpack.c.l.b16 %v1487
        %v1539 = vunpack.c.h.b16 %v1487
        %v1540 = vunpack.c.l.b16 %v1488
        %v1541 = vunpack.c.h.b16 %v1488
        %v1542 = vunpack.c.l.b16 %v1489
        %v1543 = vunpack.c.h.b16 %v1489
        %v1544 = vpack.c.b16 %v1514, %v1512
        %v1545 = vpack.c.b16 %v1515, %v1513
        %v1546 = vpack.c.b16 %v1518, %v1516
        %v1547 = vpack.c.b16 %v1519, %v1517
        %v1548 = vpack.c.b16 %v1522, %v1520
        %v1549 = vpack.c.b16 %v1523, %v1521
        %v1550 = vpack.c.b16 %v1526, %v1524
        %v1551 = vpack.c.b16 %v1527, %v1525
        %v1552 = vpack.c.b16 %v1530, %v1528
        %v1553 = vpack.c.b16 %v1531, %v1529
        %v1554 = vpack.c.b16 %v1534, %v1532
        %v1555 = vpack.c.b16 %v1535, %v1533
        %v1556 = vpack.c.b16 %v1538, %v1536
        %v1557 = vpack.c.b16 %v1539, %v1537
        %v1558 = vpack.c.b16 %v1542, %v1540
        %v1559 = vpack.c.b16 %v1543, %v1541
        %1576 = vmatpush.bf16.msra.mxu0 %v1558
        %1577 = vmatpush.bf16.msra.mxu0 %v1556
        %1578 = vmatpush.bf16.msra.mxu0 %v1554
        %1579 = vmatpush.bf16.msra.mxu0 %v1552
        %1580 = vmatpush.bf16.msra.mxu0 %v1550
        %1581 = vmatpush.bf16.msra.mxu0 %v1548
        %1582 = vmatpush.bf16.msra.mxu0 %v1546
        %1583 = vmatpush.bf16.msra.mxu0 %v1544
        %1584 = vmatmul.bf16.gmra.mxu0 %v1473
        %v1585 = vpop.f32.mrf.mxu0
        %v1586 = vadd.f32 %v1492, %v1585
        %v1587 = vpop.f32.mrf.mxu0
        %1588 = vdwg.mxu0
        %1589 = vmatpush.bf16.msra.mxu0 %v1559
        %1590 = vmatpush.bf16.msra.mxu0 %v1557
        %1591 = vmatpush.bf16.msra.mxu0 %v1555
        %1592 = vmatpush.bf16.msra.mxu0 %v1553
        %1593 = vmatpush.bf16.msra.mxu0 %v1551
        %1594 = vmatpush.bf16.msra.mxu0 %v1549
        %1595 = vmatpush.bf16.msra.mxu0 %v1547
        %1596 = vmatpush.bf16.msra.mxu0 %v1545
        %1597 = vmatmul.bf16.gmra.mxu0 %v1473
        %v1598 = vpop.f32.mrf.mxu0
        %v1599 = vadd.f32 %v1493, %v1598
        %v1600 = vpop.f32.mrf.mxu0
        %1601 = vdwg.mxu0
        %v1602 = vmax.f32 %v1586, 0.0
        %v1603 = vmax.f32 %v1599, 0.0
        %v1604 = vpack.c.bf16 %v1602, %v1602
        %v1605 = vpack.c.bf16 %v1603, %v1603
        %v1606 = vld [vmem:[#allocation16] sm:$0xf]
        %v1607 = vld [vmem:[#allocation16 + $0x4] sm:$0xf]
        %v1608 = vld [vmem:[#allocation16 + $0x8] sm:$0xf]
        %v1609 = vld [vmem:[#allocation16 + $0xc] sm:$0xf]
        %v1610 = vld [vmem:[#allocation16 + $0x10] sm:$0xf]
        %v1611 = vld [vmem:[#allocation16 + $0x14] sm:$0xf]
        %v1612 = vld [vmem:[#allocation16 + $0x18] sm:$0xf]
        %v1613 = vld [vmem:[#allocation16 + $0x1c] sm:$0xf]
        %v1614 = vld [vmem:[#allocation16 + $0x20] sm:$0xf]
        %v1615 = vld [vmem:[#allocation16 + $0x24] sm:$0xf]
        %v1616 = vld [vmem:[#allocation16 + $0x28] sm:$0xf]
        %v1617 = vld [vmem:[#allocation16 + $0x2c] sm:$0xf]
        %v1618 = vld [vmem:[#allocation16 + $0x30] sm:$0xf]
        %v1619 = vld [vmem:[#allocation16 + $0x34] sm:$0xf]
        %v1620 = vld [vmem:[#allocation16 + $0x38] sm:$0xf]
        %v1621 = vld [vmem:[#allocation16 + $0x3c] sm:$0xf]
        %v1622 = vld [vmem:[#allocation16 + $0x40] sm:$0xf]
        %v1623 = vld [vmem:[#allocation16 + $0x44] sm:$0xf]
        %v1624 = vld [vmem:[#allocation16 + $0x48] sm:$0xf]
        %v1625 = vld [vmem:[#allocation16 + $0x4c] sm:$0xf]
        %v1626 = vld [vmem:[#allocation16 + $0x50] sm:$0xf]
        %v1627 = vld [vmem:[#allocation16 + $0x54] sm:$0xf]
        %v1628 = vld [vmem:[#allocation16 + $0x58] sm:$0xf]
        %v1629 = vld [vmem:[#allocation16 + $0x5c] sm:$0xf]
        %v1630 = vld [vmem:[#allocation16 + $0x60] sm:$0xf]
        %v1631 = vld [vmem:[#allocation16 + $0x64] sm:$0xf]
        %v1632 = vld [vmem:[#allocation16 + $0x68] sm:$0xf]
        %v1633 = vld [vmem:[#allocation16 + $0x6c] sm:$0xf]
        %v1634 = vld [vmem:[#allocation16 + $0x70] sm:$0xf]
        %v1635 = vld [vmem:[#allocation16 + $0x74] sm:$0xf]
        %v1636 = vld [vmem:[#allocation16 + $0x78] sm:$0xf]
        %v1637 = vld [vmem:[#allocation16 + $0x7c] sm:$0xf]
        %v1638 = vld [vmem:[%s16] sm:$0x1]
        %v1640 = vperm.slane %v1638, 0
        %v1674 = vunpack.c.l.b16 %v1606
        %v1675 = vunpack.c.l.b16 %v1607
        %v1676 = vunpack.c.l.b16 %v1608
        %v1677 = vunpack.c.l.b16 %v1609
        %v1678 = vunpack.c.l.b16 %v1610
        %v1679 = vunpack.c.l.b16 %v1611
        %v1680 = vunpack.c.l.b16 %v1612
        %v1681 = vunpack.c.l.b16 %v1613
        %v1682 = vunpack.c.l.b16 %v1614
        %v1683 = vunpack.c.l.b16 %v1615
        %v1684 = vunpack.c.l.b16 %v1616
        %v1685 = vunpack.c.l.b16 %v1617
        %v1686 = vunpack.c.l.b16 %v1618
        %v1687 = vunpack.c.l.b16 %v1619
        %v1688 = vunpack.c.l.b16 %v1620
        %v1689 = vunpack.c.l.b16 %v1621
        %v1690 = vunpack.c.l.b16 %v1622
        %v1691 = vunpack.c.l.b16 %v1623
        %v1692 = vunpack.c.l.b16 %v1624
        %v1693 = vunpack.c.l.b16 %v1625
        %v1694 = vunpack.c.l.b16 %v1626
        %v1695 = vunpack.c.l.b16 %v1627
        %v1696 = vunpack.c.l.b16 %v1628
        %v1697 = vunpack.c.l.b16 %v1629
        %v1698 = vunpack.c.l.b16 %v1630
        %v1699 = vunpack.c.l.b16 %v1631
        %v1700 = vunpack.c.l.b16 %v1632
        %v1701 = vunpack.c.l.b16 %v1633
        %v1702 = vunpack.c.l.b16 %v1634
        %v1703 = vunpack.c.l.b16 %v1635
        %v1704 = vunpack.c.l.b16 %v1636
        %v1705 = vunpack.c.l.b16 %v1637
        %v1706 = vpack.c.b16 %v1675, %v1674
        %v1707 = vpack.c.b16 %v1677, %v1676
        %v1708 = vpack.c.b16 %v1679, %v1678
        %v1709 = vpack.c.b16 %v1681, %v1680
        %v1710 = vpack.c.b16 %v1683, %v1682
        %v1711 = vpack.c.b16 %v1685, %v1684
        %v1712 = vpack.c.b16 %v1687, %v1686
        %v1713 = vpack.c.b16 %v1689, %v1688
        %v1714 = vpack.c.b16 %v1691, %v1690
        %v1715 = vpack.c.b16 %v1693, %v1692
        %v1716 = vpack.c.b16 %v1695, %v1694
        %v1717 = vpack.c.b16 %v1697, %v1696
        %v1718 = vpack.c.b16 %v1699, %v1698
        %v1719 = vpack.c.b16 %v1701, %v1700
        %v1720 = vpack.c.b16 %v1703, %v1702
        %v1721 = vpack.c.b16 %v1705, %v1704
        %1738 = vmatpush.bf16.msra.mxu0 %v1713
        %1739 = vmatpush.bf16.msra.mxu0 %v1712
        %1740 = vmatpush.bf16.msra.mxu0 %v1711
        %1741 = vmatpush.bf16.msra.mxu0 %v1710
        %1742 = vmatpush.bf16.msra.mxu0 %v1709
        %1743 = vmatpush.bf16.msra.mxu0 %v1708
        %1744 = vmatpush.bf16.msra.mxu0 %v1707
        %1745 = vmatpush.bf16.msra.mxu0 %v1706
        %1746 = vmatmul.bf16.gmra.mxu0 %v1604
        %v1747 = vpop.f32.mrf.mxu0
        %v1748 = vadd.f32 %v1640, %v1747
        %v1749 = vpop.f32.mrf.mxu0
        %1750 = vdwg.mxu0
        %1751 = vmatpush.bf16.msra.mxu0 %v1721
        %1752 = vmatpush.bf16.msra.mxu0 %v1720
        %1753 = vmatpush.bf16.msra.mxu0 %v1719
        %1754 = vmatpush.bf16.msra.mxu0 %v1718
        %1755 = vmatpush.bf16.msra.mxu0 %v1717
        %1756 = vmatpush.bf16.msra.mxu0 %v1716
        %1757 = vmatpush.bf16.msra.mxu0 %v1715
        %1758 = vmatpush.bf16.msra.mxu0 %v1714
        %1759 = vmatmul.bf16.gmra.mxu0 %v1605
        %v1760 = vpop.f32.mrf.mxu0
        %v1761 = vadd.f32 %v1748, %v1760
        %v1762 = vpop.f32.mrf.mxu0
        %1763 = vdwg.mxu0
        %v1764 = vadd.f32 %v1761, %v1472
        %v1765 = vld [vmem:[%s17] sm:$0x1]
        %v1766 = vld [vmem:[%s18] sm:$0x1]
        %1767 = vadd.xlane.f32.xlu0 %v1764
        %v1768 = vpop.xlane.xlu0 %1767
        %v1769 = vmul.f32 %v1768, %v1446
        %v1770 = vsub.f32 %v1764, %v1769
        %v1771 = vmul.f32 %v1770, %v1770
        %1772 = vadd.xlane.f32.xlu0 %v1771
        %v1773 = vpop.xlane.xlu0 %1772
        %v1774 = vmul.f32 %v1773, %v1446
        %v1775 = vadd.f32 %v1774, 1e-05
        %v1776 = vrsqrt.pop %v1775
        %v1777 = vmul.f32 %v1776, %v1775
        %v1778 = vmul.f32 %v1777, %v1776
        %v1779 = vmul.f32 0.5, %v1778
        %v1780 = vsub.f32 1.5, %v1779
        %v1781 = vmul.f32 %v1776, %v1780
        %vm1782 = vweird.f32 %v1775
        %vm1783 = vweird.f32 %v1776
        %vm1784 = vmor %vm1782, %vm1783
        %v1785 = vsel %vm1784, %v1776, %v1781
        %v1786 = vmul.f32 %v1770, %v1785
        %v1788 = vperm.slane %v1765, 0
        %v1790 = vmul.f32 %v1786, %v1788
        %v1792 = vperm.slane %v1766, 0
        %v1794 = vadd.f32 %v1790, %v1792
        %1795 = vst [vmem:[%s792] sm:$0xff] %v1794
        %s1796 = sand.u32 %s464, 1
        %s1797 = scalar_lea.sflag [#allocation4], %s1796
        %s1798 = sand.u32 %s464, 1
        %s1799 = smul.addr %s1798, 8
        %s1800 = scalar_lea.vmem [#allocation17], %s1799
        // Predicated region
        $region133: #{tpu_custom_call.1} parent=95 // pred_check
          %p1801 = pneg %p474
        $region134: #{tpu_custom_call.1} parent=95 // pred_check_branch
          %1803 = sbr.rel (%p1801) target = $region136
        $region135: #{tpu_custom_call.1} parent=95 // pred_region
          %1805 = vsyncadd %s1797, 0
          %s1806 = smul.addr %s42, 8
          %s1807 = scalar_lea.hbm %s19, %s1806
          %s1809 = sshll.u32 %s1800, 4
          %s1810 = int_to_ptr.vmem [resolvable:$true] %s1809
          %s1811 = sshll.u32 %s1807, 4
          %s1812 = int_to_ptr.hbm [resolvable:$true] %s1811
          %1814 = dma.vmem_to_hbm [thread:$0]  %s1810, 128, %s1812, %s1797
        $region136: #{tpu_custom_call.1} parent=95 // pred_fallthru
          _
      $region96: #{tpu_custom_call.1} parent=5 // pred_fallthru
        _
      %p1815 = scmp.le.s32.totalorder 2, %s37
      // Predicated region
      $region137: #{tpu_custom_call.1} parent=5 // pred_check
        %p1816 = pneg %p1815
      $region138: #{tpu_custom_call.1} parent=5 // pred_check_branch
        %1818 = sbr.rel (%p1816) target = $region140
      $region139: #{tpu_custom_call.1} parent=5 // pred_region
        %s1819 = ssub.s32 %s37, 2
        // Predicated region
        $region141: #{tpu_custom_call.1} parent=139 // pred_check
          %p1820 = pneg %p480
        $region142: #{tpu_custom_call.1} parent=139 // pred_check_branch
          %1822 = sbr.rel (%p1820) target = $region144
        $region143: #{tpu_custom_call.1} parent=139 // pred_region
          %s1823 = sand.u32 %s465, 1
          %s1824 = scalar_lea.sflag [#allocation4], %s1823
          %s1825 = sand.u32 %s465, 1
          %s1826 = smul.addr %s1825, 8
          %s1827 = scalar_lea.vmem [#allocation17], %s1826
          %1829 = dma.done %s1824, 128
        $region144: #{tpu_custom_call.1} parent=139 // pred_fallthru
          _
      $region140: #{tpu_custom_call.1} parent=5 // pred_fallthru
        _
    $region6: #{tpu_custom_call.1} parent=1 // loop_footer
      %s41 = sadd.s32 1, %s37
    $region7: #{tpu_custom_call.1} parent=1 // loop_footer_branch
      %36 = sbr.rel target = $region3
    $region8: #{tpu_custom_call.1} parent=1 // loop_exit
      _
    %1830 = vsyncpa [#allocation3], 1
    %s1831 = scalar_lea.sflag [#allocation3], 1
    %1832 = vsyncpa %s1831, 1
    %1833 = vsyncpa [#allocation6], 1
    %s1834 = scalar_lea.sflag [#allocation6], 1
    %1835 = vsyncpa %s1834, 1
    %1836 = vsyncpa [#allocation9], 1
    %1837 = vsyncpa [#allocation12], 1
    %1838 = vsyncpa [#allocation15], 1
    %1839 = vsyncpa [#allocation4], 1
    %s1840 = scalar_lea.sflag [#allocation4], 1
    %1841 = vsyncpa %s1840, 1

</llo_original>
